<compile_context>
chip_gen: v5e
topology: v5e:2x2
jax: 0.10.0
libtpu: 0.0.40
codegen_flags: <defaults>
</compile_context>

<pallas_src>
import functools
import math

import jax
import jax.numpy as jnp
from jax import lax
from jax.experimental import pallas as pl
from jax.experimental.pallas import tpu as pltpu


# ------------------------------ model config ---------------------------------

VOCAB = 100
HIDDEN = 32
N_LAYERS = 2
N_HEADS = 2
INTERMEDIATE = 64
MAX_POS = 16
TYPE_VOCAB = 2

LN_EPS = 1e-12
MATMUL_DTYPE = jnp.bfloat16   # MXU-native input dtype; accumulation stays fp32.


# ------------------------------ small helpers --------------------------------

def _tile_rows(m, cap=128):
    """Largest row tile <= cap that divides m (respects the (8,128) constraint)."""
    if m <= cap:
        return m
    t = cap
    while t >= 8:
        if m % t == 0:
            return t
        t //= 2
    return m


def _layer_norm_f32(x, gamma, beta):
    mean = jnp.mean(x, axis=-1, keepdims=True)
    c = x - mean
    var = jnp.mean(c * c, axis=-1, keepdims=True)
    return c * lax.rsqrt(var + LN_EPS) * gamma + beta


def _gelu_tanh(x):
    c = math.sqrt(2.0 / math.pi)
    return 0.5 * x * (1.0 + jnp.tanh(c * (x + 0.044715 * x * x * x)))


# ------------------------------ Pallas kernels -------------------------------

def _dense_kernel(x_ref, w_ref, b_ref, o_ref, *, activation):
    """o = act(x @ w + b) on a (TM, K) row tile; fp32 accumulation."""
    x = x_ref[...].astype(MATMUL_DTYPE)
    acc = jnp.dot(x, w_ref[...], preferred_element_type=jnp.float32) + b_ref[...]
    if activation == "tanh":
        acc = jnp.tanh(acc)
    elif activation == "gelu":
        acc = _gelu_tanh(acc)
    o_ref[...] = acc.astype(o_ref.dtype)


def dense(x, w, b, activation=None, out_dtype=jnp.float32):
    M, K = x.shape
    N = w.shape[1]
    tm = _tile_rows(M)
    kern = functools.partial(_dense_kernel, activation=activation)
    return pl.pallas_call(
        kern,
        out_shape=jax.ShapeDtypeStruct((M, N), out_dtype),
        grid=(M // tm,),
        in_specs=[
            pl.BlockSpec((tm, K), lambda i: (i, 0)),
            pl.BlockSpec((K, N), lambda i: (0, 0)),
            pl.BlockSpec((1, N), lambda i: (0, 0)),
        ],
        out_specs=pl.BlockSpec((tm, N), lambda i: (i, 0)),
        compiler_params=pltpu.CompilerParams(dimension_semantics=("parallel",)),
    )(x, w, b.reshape(1, N))


def _ln_kernel(x_ref, g_ref, b_ref, o_ref):
    """No-residual LayerNorm (embeddings) — no zeros buffer DMA'd in."""
    o_ref[...] = _layer_norm_f32(x_ref[...], g_ref[...], b_ref[...]).astype(o_ref.dtype)


def layer_norm(x, gamma, beta):
    M, H = x.shape
    tm = _tile_rows(M)
    return pl.pallas_call(
        _ln_kernel,
        out_shape=jax.ShapeDtypeStruct((M, H), jnp.float32),
        grid=(M // tm,),
        in_specs=[
            pl.BlockSpec((tm, H), lambda i: (i, 0)),
            pl.BlockSpec((1, H), lambda i: (0, 0)),
            pl.BlockSpec((1, H), lambda i: (0, 0)),
        ],
        out_specs=pl.BlockSpec((tm, H), lambda i: (i, 0)),
        compiler_params=pltpu.CompilerParams(dimension_semantics=("parallel",)),
    )(x, gamma.reshape(1, H), beta.reshape(1, H))


def _attn_kernel(qkv_ref, m_ref, o_ref, *, n_heads, hidden, scale):
    """One batch element: packed qkv (S, 3H) -> context (S, H), all heads inside."""
    qkv = qkv_ref[...]                    # (S, 3H) bf16
    mask = m_ref[...]                     # (1, S)  f32 additive key mask
    dh = hidden // n_heads
    ctxs = []
    for h in range(n_heads):              # static unrolled head loop
        q = qkv[:, h * dh:(h + 1) * dh]
        k = qkv[:, hidden + h * dh: hidden + (h + 1) * dh]
        v = qkv[:, 2 * hidden + h * dh: 2 * hidden + (h + 1) * dh]
        s = lax.dot_general(q, k, (((1,), (1,)), ((), ())),
                            preferred_element_type=jnp.float32) * scale
        s = s + mask
        s = s - jnp.max(s, axis=-1, keepdims=True)      # stable softmax
        p = jnp.exp(s)
        inv = pl.reciprocal(jnp.sum(p, axis=-1, keepdims=True), approx=True)
        p = (p * inv).astype(v.dtype)
        ctxs.append(jnp.dot(p, v, preferred_element_type=jnp.float32))
    # single lane-dense (S, H) store instead of per-head masked partial stores
    o_ref[...] = jnp.concatenate(ctxs, axis=-1).astype(o_ref.dtype)


def attention(qkv, add_mask, *, n_heads, hidden):
    """qkv: (B, S, 3H) packed; add_mask: (B, 1, S) additive mask."""
    B, S, H3 = qkv.shape
    kern = functools.partial(_attn_kernel, n_heads=n_heads, hidden=hidden,
                             scale=1.0 / math.sqrt(hidden // n_heads))
    return pl.pallas_call(
        kern,
        out_shape=jax.ShapeDtypeStruct((B, S, hidden), MATMUL_DTYPE),
        grid=(B,),
        in_specs=[
            pl.BlockSpec((None, S, H3), lambda b: (b, 0, 0)),   # squeezed batch dim
            pl.BlockSpec((None, 1, S), lambda b: (b, 0, 0)),
        ],
        out_specs=pl.BlockSpec((None, S, hidden), lambda b: (b, 0, 0)),
        compiler_params=pltpu.CompilerParams(dimension_semantics=("parallel",)),
    )(qkv, add_mask)


def _attn_out_ln_kernel(ctx_ref, w_ref, b_ref, res_ref, g_ref, beta_ref, o_ref):
    """o = LayerNorm(ctx @ wo + bo + residual) — fused projection epilogue."""
    y = jnp.dot(ctx_ref[...], w_ref[...], preferred_element_type=jnp.float32) + b_ref[...]
    z = y + res_ref[...]
    o_ref[...] = _layer_norm_f32(z, g_ref[...], beta_ref[...]).astype(o_ref.dtype)


def attn_out_ln(ctx, w, b, residual, gamma, beta):
    M, H = residual.shape
    tm = _tile_rows(M)
    return pl.pallas_call(
        _attn_out_ln_kernel,
        out_shape=jax.ShapeDtypeStruct((M, H), jnp.float32),
        grid=(M // tm,),
        in_specs=[
            pl.BlockSpec((tm, H), lambda i: (i, 0)),
            pl.BlockSpec((H, H), lambda i: (0, 0)),
            pl.BlockSpec((1, H), lambda i: (0, 0)),
            pl.BlockSpec((tm, H), lambda i: (i, 0)),
            pl.BlockSpec((1, H), lambda i: (0, 0)),
            pl.BlockSpec((1, H), lambda i: (0, 0)),
        ],
        out_specs=pl.BlockSpec((tm, H), lambda i: (i, 0)),
        compiler_params=pltpu.CompilerParams(dimension_semantics=("parallel",)),
    )(ctx, w, b.reshape(1, H), residual, gamma.reshape(1, H), beta.reshape(1, H))


def _ffn_ln_kernel(x_ref, wi_ref, bi_ref, wo_ref, bo_ref, g_ref, beta_ref, o_ref):
    """o = LayerNorm(gelu(x @ wi + bi) @ wo2 + bo2 + x); intermediate stays in VMEM."""
    x = x_ref[...]                                           # fp32 residual stream
    h = jnp.dot(x.astype(MATMUL_DTYPE), wi_ref[...],
                preferred_element_type=jnp.float32) + bi_ref[...]
    h = _gelu_tanh(h)
    y = jnp.dot(h.astype(MATMUL_DTYPE), wo_ref[...],
                preferred_element_type=jnp.float32) + bo_ref[...]
    z = y + x
    o_ref[...] = _layer_norm_f32(z, g_ref[...], beta_ref[...]).astype(o_ref.dtype)


def ffn_ln(x, wi, bi, wo2, bo2, gamma, beta):
    M, H = x.shape
    I = wi.shape[1]
    tm = _tile_rows(M)
    return pl.pallas_call(
        _ffn_ln_kernel,
        out_shape=jax.ShapeDtypeStruct((M, H), jnp.float32),
        grid=(M // tm,),
        in_specs=[
            pl.BlockSpec((tm, H), lambda i: (i, 0)),
            pl.BlockSpec((H, I), lambda i: (0, 0)),
            pl.BlockSpec((1, I), lambda i: (0, 0)),
            pl.BlockSpec((I, H), lambda i: (0, 0)),
            pl.BlockSpec((1, H), lambda i: (0, 0)),
            pl.BlockSpec((1, H), lambda i: (0, 0)),
            pl.BlockSpec((1, H), lambda i: (0, 0)),
        ],
        out_specs=pl.BlockSpec((tm, H), lambda i: (i, 0)),
        compiler_params=pltpu.CompilerParams(dimension_semantics=("parallel",)),
    )(x, wi, bi.reshape(1, I), wo2, bo2.reshape(1, H),
      gamma.reshape(1, H), beta.reshape(1, H))


# ------------------------------ BERT forward ----------------------------------

def init_params(key):
    keys = iter(jax.random.split(key, 8 + N_LAYERS * 8))

    def norm(shape, dtype=jnp.float32):
        return (0.02 * jax.random.normal(next(keys), shape, dtype=jnp.float32)).astype(dtype)

    params = {
        "word_emb": norm((VOCAB, HIDDEN)),
        "pos_emb": norm((MAX_POS, HIDDEN)),
        "type_emb": norm((TYPE_VOCAB, HIDDEN)),
        "emb_ln_g": jnp.ones((HIDDEN,), jnp.float32),
        "emb_ln_b": jnp.zeros((HIDDEN,), jnp.float32),
        "pool_w": norm((HIDDEN, HIDDEN), MATMUL_DTYPE),
        "pool_b": jnp.zeros((HIDDEN,), jnp.float32),
        "layers": [],
    }
    for _ in range(N_LAYERS):
        params["layers"].append({
            # fused Q/K/V projection: one (H, 3H) weight
            "wqkv": norm((HIDDEN, 3 * HIDDEN), MATMUL_DTYPE),
            "bqkv": jnp.zeros((3 * HIDDEN,), jnp.float32),
            "wo": norm((HIDDEN, HIDDEN), MATMUL_DTYPE),
            "bo": jnp.zeros((HIDDEN,), jnp.float32),
            "ln1_g": jnp.ones((HIDDEN,), jnp.float32),
            "ln1_b": jnp.zeros((HIDDEN,), jnp.float32),
            "wi": norm((HIDDEN, INTERMEDIATE), MATMUL_DTYPE),
            "bi": jnp.zeros((INTERMEDIATE,), jnp.float32),
            "wo2": norm((INTERMEDIATE, HIDDEN), MATMUL_DTYPE),
            "bo2": jnp.zeros((HIDDEN,), jnp.float32),
            "ln2_g": jnp.ones((HIDDEN,), jnp.float32),
            "ln2_b": jnp.zeros((HIDDEN,), jnp.float32),
        })
    return params


def bert_encoder_forward(params, token, att_mask, *, n_heads=N_HEADS):
    """Returns (sequence_output (B,S,H), pooled_output (B,H)) like HF BertModel."""
    B, S = token.shape
    H = params["word_emb"].shape[1]
    M = B * S

    # --- embeddings (gathers are JAX glue; LayerNorm in Pallas) ---
    pos_ids = jnp.arange(S, dtype=jnp.int32)
    type_ids = jnp.zeros((B, S), dtype=jnp.int32)
    emb = (params["word_emb"][token]
           + params["pos_emb"][pos_ids][None, :, :]
           + params["type_emb"][type_ids])
    x = layer_norm(emb.reshape(M, H), params["emb_ln_g"], params["emb_ln_b"])

    # extended additive attention mask, (B, 1, S)
    add_mask = ((1.0 - att_mask.astype(jnp.float32)) * -10000.0).reshape(B, 1, S)

    for lyr in params["layers"]:
        # --- self attention (fused QKV, packed-head attention, fused out-proj+LN) ---
        qkv = dense(x, lyr["wqkv"], lyr["bqkv"], out_dtype=MATMUL_DTYPE)      # (M, 3H)
        ctx = attention(qkv.reshape(B, S, 3 * H), add_mask,
                        n_heads=n_heads, hidden=H)                            # (B, S, H)
        x = attn_out_ln(ctx.reshape(M, H), lyr["wo"], lyr["bo"], x,
                        lyr["ln1_g"], lyr["ln1_b"])
        # --- feed forward (fully fused: matmul + GELU + matmul + residual + LN) ---
        x = ffn_ln(x, lyr["wi"], lyr["bi"], lyr["wo2"], lyr["bo2"],
                   lyr["ln2_g"], lyr["ln2_b"])

    seq_out = x.reshape(B, S, H)                    # bert_output[0]
    pooled = dense(seq_out[:, 0, :], params["pool_w"], params["pool_b"],
                   activation="tanh", out_dtype=jnp.float32)
    return seq_out, pooled                          # (x, pool_output)


# --------------------------------- main ----------------------------------------

if __name__ == "__main__":
    key = jax.random.PRNGKey(0)
    pkey, tkey = jax.random.split(key)

    params = init_params(pkey)

    B, S = 2, 8
    token = jax.random.randint(tkey, (B, S), 0, VOCAB, dtype=jnp.int32)
    lengths = jnp.array([8, 5], dtype=jnp.int32)
    att_mask = (jnp.arange(S, dtype=jnp.int32)[None, :] < lengths[:, None]).astype(jnp.int32)

    fwd = jax.jit(functools.partial(bert_encoder_forward, n_heads=N_HEADS))
    seq_out, pooled = fwd(params, token, att_mask)
    jax.block_until_ready((seq_out, pooled))

    assert seq_out.shape == (B, S, HIDDEN) and seq_out.dtype == jnp.float32
    assert pooled.shape == (B, HIDDEN) and pooled.dtype == jnp.float32
    assert bool(jnp.all(jnp.isfinite(seq_out))) and bool(jnp.all(jnp.isfinite(pooled)))
    print("KERNEL_OK")
</pallas_src>

<mosaic_0001>
module attributes {stable_mosaic.version = 11 : i64} {
  func.func @_ln_kernel(%arg0: i32, %arg1: memref<16x32xf32, #tpu.memory_space<vmem>>, %arg2: memref<1x32xf32, #tpu.memory_space<vmem>>, %arg3: memref<1x32xf32, #tpu.memory_space<vmem>>, %arg4: memref<16x32xf32, #tpu.memory_space<vmem>>) attributes {dimension_semantics = [#tpu.dimension_semantics<parallel>], iteration_bounds = array<i64: 1>, scalar_prefetch = 0 : i64, scratch_operands = 0 : i64, tpu.core_type = #tpu.core_type<tc>, window_params = [{transform_indices = @transform_0, window_bounds = array<i64: 16, 32>}, {pipeline_mode = #tpu.pipeline_mode<synchronous>, transform_indices = @transform_1, window_bounds = array<i64: 1, 32>}, {pipeline_mode = #tpu.pipeline_mode<synchronous>, transform_indices = @transform_2, window_bounds = array<i64: 1, 32>}, {transform_indices = @transform_3, window_bounds = array<i64: 16, 32>}]} {
    %c0 = arith.constant 0 : index
    %c0_0 = arith.constant 0 : index
    %0 = vector.load %arg1[%c0, %c0_0] : memref<16x32xf32, #tpu.memory_space<vmem>>, vector<16x32xf32>
    %c0_1 = arith.constant 0 : index
    %c0_2 = arith.constant 0 : index
    %1 = vector.load %arg2[%c0_1, %c0_2] : memref<1x32xf32, #tpu.memory_space<vmem>>, vector<1x32xf32>
    %c0_3 = arith.constant 0 : index
    %c0_4 = arith.constant 0 : index
    %2 = vector.load %arg3[%c0_3, %c0_4] : memref<1x32xf32, #tpu.memory_space<vmem>>, vector<1x32xf32>
    %cst = arith.constant dense<0.000000e+00> : vector<16xf32>
    %3 = vector.multi_reduction <add>, %0, %cst [1] : vector<16x32xf32> to vector<16xf32>
    %4 = vector.shape_cast %3 : vector<16xf32> to vector<16x1xf32>
    %cst_5 = arith.constant 3.200000e+01 : f32
    %5 = vector.broadcast %cst_5 : f32 to vector<16x1xf32>
    %6 = arith.divf %4, %5 : vector<16x1xf32>
    %7 = vector.broadcast %6 : vector<16x1xf32> to vector<16x32xf32>
    %8 = arith.subf %0, %7 : vector<16x32xf32>
    %9 = arith.mulf %8, %8 : vector<16x32xf32>
    %cst_6 = arith.constant dense<0.000000e+00> : vector<16xf32>
    %10 = vector.multi_reduction <add>, %9, %cst_6 [1] : vector<16x32xf32> to vector<16xf32>
    %11 = vector.shape_cast %10 : vector<16xf32> to vector<16x1xf32>
    %cst_7 = arith.constant 3.200000e+01 : f32
    %12 = vector.broadcast %cst_7 : f32 to vector<16x1xf32>
    %13 = arith.divf %11, %12 : vector<16x1xf32>
    %cst_8 = arith.constant 9.99999996E-13 : f32
    %14 = vector.broadcast %cst_8 : f32 to vector<16x1xf32>
    %15 = arith.addf %13, %14 : vector<16x1xf32>
    %16 = math.rsqrt %15 : vector<16x1xf32>
    %17 = vector.broadcast %16 : vector<16x1xf32> to vector<16x32xf32>
    %18 = arith.mulf %8, %17 : vector<16x32xf32>
    %19 = vector.broadcast %1 : vector<1x32xf32> to vector<16x32xf32>
    %20 = arith.mulf %18, %19 : vector<16x32xf32>
    %21 = vector.broadcast %2 : vector<1x32xf32> to vector<16x32xf32>
    %22 = arith.addf %20, %21 : vector<16x32xf32>
    %c0_9 = arith.constant 0 : index
    %c0_10 = arith.constant 0 : index
    %23 = vector.load %arg4[%c0_9, %c0_10] : memref<16x32xf32, #tpu.memory_space<vmem>>, vector<16x32xf32>
    tpu.vector_store %arg4[%c0_9, %c0_10], %22 {strides = array<i32>} : memref<16x32xf32, #tpu.memory_space<vmem>>, vector<16x32xf32>,
    return
  }
  func.func @transform_0(%arg0: i32) -> (i32, i32) {
    %c0_i32 = arith.constant 0 : i32
    %c0_i32_0 = arith.constant 0 : i32
    return %arg0, %c0_i32 : i32, i32
  }
  func.func @transform_1(%arg0: i32) -> (i32, i32) {
    %c0_i32 = arith.constant 0 : i32
    %c0_i32_0 = arith.constant 0 : i32
    %c0_i32_1 = arith.constant 0 : i32
    return %c0_i32, %c0_i32_0 : i32, i32
  }
  func.func @transform_2(%arg0: i32) -> (i32, i32) {
    %c0_i32 = arith.constant 0 : i32
    %c0_i32_0 = arith.constant 0 : i32
    %c0_i32_1 = arith.constant 0 : i32
    return %c0_i32, %c0_i32_0 : i32, i32
  }
  func.func @transform_3(%arg0: i32) -> (i32, i32) {
    %c0_i32 = arith.constant 0 : i32
    %c0_i32_0 = arith.constant 0 : i32
    return %arg0, %c0_i32 : i32, i32
  }
}

module attributes {stable_mosaic.version = 11 : i64} {
  func.func @_dense_kernel(%arg0: i32, %arg1: memref<16x32xf32, #tpu.memory_space<vmem>>, %arg2: memref<32x96xbf16, #tpu.memory_space<vmem>>, %arg3: memref<1x96xf32, #tpu.memory_space<vmem>>, %arg4: memref<16x96xbf16, #tpu.memory_space<vmem>>) attributes {dimension_semantics = [#tpu.dimension_semantics<parallel>], iteration_bounds = array<i64: 1>, scalar_prefetch = 0 : i64, scratch_operands = 0 : i64, tpu.core_type = #tpu.core_type<tc>, window_params = [{transform_indices = @transform_0, window_bounds = array<i64: 16, 32>}, {pipeline_mode = #tpu.pipeline_mode<synchronous>, transform_indices = @transform_1, window_bounds = array<i64: 32, 96>}, {pipeline_mode = #tpu.pipeline_mode<synchronous>, transform_indices = @transform_2, window_bounds = array<i64: 1, 96>}, {transform_indices = @transform_3, window_bounds = array<i64: 16, 96>}]} {
    %c0 = arith.constant 0 : index
    %c0_0 = arith.constant 0 : index
    %0 = vector.load %arg1[%c0, %c0_0] : memref<16x32xf32, #tpu.memory_space<vmem>>, vector<16x32xf32>
    %1 = arith.truncf %0 : vector<16x32xf32> to vector<16x32xbf16>
    %c0_1 = arith.constant 0 : index
    %c0_2 = arith.constant 0 : index
    %2 = vector.load %arg2[%c0_1, %c0_2] : memref<32x96xbf16, #tpu.memory_space<vmem>>, vector<32x96xbf16>
    %cst = arith.constant dense<0.000000e+00> : vector<16x96xf32>
    %3 = tpu.matmul %1, %2, %cst {dimension_numbers = #tpu.dot_dimension_numbers<[1], [0], [0], [1], [0, 0, 1, 1], [], []>} : vector<16x32xbf16>, vector<32x96xbf16>, vector<16x96xf32> -> vector<16x96xf32>
    %c0_3 = arith.constant 0 : index
    %c0_4 = arith.constant 0 : index
    %4 = vector.load %arg3[%c0_3, %c0_4] : memref<1x96xf32, #tpu.memory_space<vmem>>, vector<1x96xf32>
    %5 = vector.broadcast %4 : vector<1x96xf32> to vector<16x96xf32>
    %6 = arith.addf %3, %5 : vector<16x96xf32>
    %7 = arith.truncf %6 : vector<16x96xf32> to vector<16x96xbf16>
    %c0_5 = arith.constant 0 : index
    %c0_6 = arith.constant 0 : index
    %8 = vector.load %arg4[%c0_5, %c0_6] : memref<16x96xbf16, #tpu.memory_space<vmem>>, vector<16x96xbf16>
    tpu.vector_store %arg4[%c0_5, %c0_6], %7 {strides = array<i32>} : memref<16x96xbf16, #tpu.memory_space<vmem>>, vector<16x96xbf16>,
    return
  }
  func.func @transform_0(%arg0: i32) -> (i32, i32) {
    %c0_i32 = arith.constant 0 : i32
    %c0_i32_0 = arith.constant 0 : i32
    return %arg0, %c0_i32 : i32, i32
  }
  func.func @transform_1(%arg0: i32) -> (i32, i32) {
    %c0_i32 = arith.constant 0 : i32
    %c0_i32_0 = arith.constant 0 : i32
    %c0_i32_1 = arith.constant 0 : i32
    return %c0_i32, %c0_i32_0 : i32, i32
  }
  func.func @transform_2(%arg0: i32) -> (i32, i32) {
    %c0_i32 = arith.constant 0 : i32
    %c0_i32_0 = arith.constant 0 : i32
    %c0_i32_1 = arith.constant 0 : i32
    return %c0_i32, %c0_i32_0 : i32, i32
  }
  func.func @transform_3(%arg0: i32) -> (i32, i32) {
    %c0_i32 = arith.constant 0 : i32
    %c0_i32_0 = arith.constant 0 : i32
    return %arg0, %c0_i32 : i32, i32
  }
}

module attributes {stable_mosaic.version = 11 : i64} {
  func.func @_attn_kernel(%arg0: i32, %arg1: memref<1x8x96xbf16, #tpu.memory_space<vmem>>, %arg2: memref<1x1x8xf32, #tpu.memory_space<vmem>>, %arg3: memref<1x8x32xbf16, #tpu.memory_space<vmem>>) attributes {dimension_semantics = [#tpu.dimension_semantics<parallel>], iteration_bounds = array<i64: 2>, scalar_prefetch = 0 : i64, scratch_operands = 0 : i64, tpu.core_type = #tpu.core_type<tc>, window_params = [{transform_indices = @transform_0, window_bounds = array<i64: 1, 8, 96>}, {transform_indices = @transform_1, window_bounds = array<i64: 1, 1, 8>}, {transform_indices = @transform_2, window_bounds = array<i64: 1, 8, 32>}]} {
    %c0 = arith.constant 0 : index
    %c0_0 = arith.constant 0 : index
    %c0_1 = arith.constant 0 : index
    %0 = vector.load %arg1[%c0, %c0_0, %c0_1] : memref<1x8x96xbf16, #tpu.memory_space<vmem>>, vector<1x8x96xbf16>
    %1 = vector.shape_cast %0 : vector<1x8x96xbf16> to vector<8x96xbf16>
    %c0_2 = arith.constant 0 : index
    %c0_3 = arith.constant 0 : index
    %c0_4 = arith.constant 0 : index
    %2 = vector.load %arg2[%c0_2, %c0_3, %c0_4] : memref<1x1x8xf32, #tpu.memory_space<vmem>>, vector<1x1x8xf32>
    %3 = vector.shape_cast %2 : vector<1x1x8xf32> to vector<1x8xf32>
    %4 = vector.extract_strided_slice %1 {offsets = [0, 0], sizes = [8, 16], strides = [1, 1]} : vector<8x96xbf16> to vector<8x16xbf16>
    %5 = vector.extract_strided_slice %1 {offsets = [0, 32], sizes = [8, 16], strides = [1, 1]} : vector<8x96xbf16> to vector<8x16xbf16>
    %6 = vector.extract_strided_slice %1 {offsets = [0, 64], sizes = [8, 16], strides = [1, 1]} : vector<8x96xbf16> to vector<8x16xbf16>
    %cst = arith.constant dense<0.000000e+00> : vector<8x8xf32>
    %7 = tpu.matmul %4, %5, %cst {dimension_numbers = #tpu.dot_dimension_numbers<[1], [1], [0], [0], [0, 0, 1, 0], [], []>} : vector<8x16xbf16>, vector<8x16xbf16>, vector<8x8xf32> -> vector<8x8xf32>
    %cst_5 = arith.constant 2.500000e-01 : f32
    %8 = vector.broadcast %cst_5 : f32 to vector<8x8xf32>
    %9 = arith.mulf %7, %8 : vector<8x8xf32>
    %10 = vector.broadcast %3 : vector<1x8xf32> to vector<8x8xf32>
    %11 = arith.addf %9, %10 : vector<8x8xf32>
    %cst_6 = arith.constant dense<0xFF800000> : vector<8xf32>
    %12 = vector.multi_reduction <maximumf>, %11, %cst_6 [1] : vector<8x8xf32> to vector<8xf32>
    %13 = vector.shape_cast %12 : vector<8xf32> to vector<8x1xf32>
    %14 = vector.broadcast %13 : vector<8x1xf32> to vector<8x8xf32>
    %15 = arith.subf %11, %14 : vector<8x8xf32>
    %16 = math.exp %15 : vector<8x8xf32>
    %cst_7 = arith.constant dense<0.000000e+00> : vector<8xf32>
    %17 = vector.multi_reduction <add>, %16, %cst_7 [1] : vector<8x8xf32> to vector<8xf32>
    %18 = vector.shape_cast %17 : vector<8xf32> to vector<8x1xf32>
    %19 = tpu.reciprocal %18 {approx = true} : vector<8x1xf32> -> vector<8x1xf32>
    %20 = vector.broadcast %19 : vector<8x1xf32> to vector<8x8xf32>
    %21 = arith.mulf %16, %20 : vector<8x8xf32>
    %22 = arith.truncf %21 : vector<8x8xf32> to vector<8x8xbf16>
    %cst_8 = arith.constant dense<0.000000e+00> : vector<8x16xf32>
    %23 = tpu.matmul %22, %6, %cst_8 {dimension_numbers = #tpu.dot_dimension_numbers<[1], [0], [0], [1], [0, 0, 1, 1], [], []>} : vector<8x8xbf16>, vector<8x16xbf16>, vector<8x16xf32> -> vector<8x16xf32>
    %24 = vector.extract_strided_slice %1 {offsets = [0, 16], sizes = [8, 16], strides = [1, 1]} : vector<8x96xbf16> to vector<8x16xbf16>
    %25 = vector.extract_strided_slice %1 {offsets = [0, 48], sizes = [8, 16], strides = [1, 1]} : vector<8x96xbf16> to vector<8x16xbf16>
    %26 = vector.extract_strided_slice %1 {offsets = [0, 80], sizes = [8, 16], strides = [1, 1]} : vector<8x96xbf16> to vector<8x16xbf16>
    %cst_9 = arith.constant dense<0.000000e+00> : vector<8x8xf32>
    %27 = tpu.matmul %24, %25, %cst_9 {dimension_numbers = #tpu.dot_dimension_numbers<[1], [1], [0], [0], [0, 0, 1, 0], [], []>} : vector<8x16xbf16>, vector<8x16xbf16>, vector<8x8xf32> -> vector<8x8xf32>
    %cst_10 = arith.constant 2.500000e-01 : f32
    %28 = vector.broadcast %cst_10 : f32 to vector<8x8xf32>
    %29 = arith.mulf %27, %28 : vector<8x8xf32>
    %30 = vector.broadcast %3 : vector<1x8xf32> to vector<8x8xf32>
    %31 = arith.addf %29, %30 : vector<8x8xf32>
    %cst_11 = arith.constant dense<0xFF800000> : vector<8xf32>
    %32 = vector.multi_reduction <maximumf>, %31, %cst_11 [1] : vector<8x8xf32> to vector<8xf32>
    %33 = vector.shape_cast %32 : vector<8xf32> to vector<8x1xf32>
    %34 = vector.broadcast %33 : vector<8x1xf32> to vector<8x8xf32>
    %35 = arith.subf %31, %34 : vector<8x8xf32>
    %36 = math.exp %35 : vector<8x8xf32>
    %cst_12 = arith.constant dense<0.000000e+00> : vector<8xf32>
    %37 = vector.multi_reduction <add>, %36, %cst_12 [1] : vector<8x8xf32> to vector<8xf32>
    %38 = vector.shape_cast %37 : vector<8xf32> to vector<8x1xf32>
    %39 = tpu.reciprocal %38 {approx = true} : vector<8x1xf32> -> vector<8x1xf32>
    %40 = vector.broadcast %39 : vector<8x1xf32> to vector<8x8xf32>
    %41 = arith.mulf %36, %40 : vector<8x8xf32>
    %42 = arith.truncf %41 : vector<8x8xf32> to vector<8x8xbf16>
    %cst_13 = arith.constant dense<0.000000e+00> : vector<8x16xf32>
    %43 = tpu.matmul %42, %26, %cst_13 {dimension_numbers = #tpu.dot_dimension_numbers<[1], [0], [0], [1], [0, 0, 1, 1], [], []>} : vector<8x8xbf16>, vector<8x16xbf16>, vector<8x16xf32> -> vector<8x16xf32>
    %44 = tpu.concatenate %23, %43 in 1 : vector<8x16xf32>, vector<8x16xf32> -> vector<8x32xf32>
    %45 = arith.truncf %44 : vector<8x32xf32> to vector<8x32xbf16>
    %c0_14 = arith.constant 0 : index
    %c0_15 = arith.constant 0 : index
    %c0_16 = arith.constant 0 : index
    %46 = vector.load %arg3[%c0_14, %c0_15, %c0_16] : memref<1x8x32xbf16, #tpu.memory_space<vmem>>, vector<1x8x32xbf16>
    %47 = vector.shape_cast %46 : vector<1x8x32xbf16> to vector<8x32xbf16>
    %48 = vector.shape_cast %45 : vector<8x32xbf16> to vector<1x8x32xbf16>
    tpu.vector_store %arg3[%c0_14, %c0_15, %c0_16], %48 {strides = array<i32>} : memref<1x8x32xbf16, #tpu.memory_space<vmem>>, vector<1x8x32xbf16>,
    return
  }
  func.func @transform_0(%arg0: i32) -> (i32, i32, i32) {
    %c0_i32 = arith.constant 0 : i32
    %c0_i32_0 = arith.constant 0 : i32
    %c0_i32_1 = arith.constant 0 : i32
    return %arg0, %c0_i32, %c0_i32_0 : i32, i32, i32
  }
  func.func @transform_1(%arg0: i32) -> (i32, i32, i32) {
    %c0_i32 = arith.constant 0 : i32
    %c0_i32_0 = arith.constant 0 : i32
    %c0_i32_1 = arith.constant 0 : i32
    return %arg0, %c0_i32, %c0_i32_0 : i32, i32, i32
  }
  func.func @transform_2(%arg0: i32) -> (i32, i32, i32) {
    %c0_i32 = arith.constant 0 : i32
    %c0_i32_0 = arith.constant 0 : i32
    %c0_i32_1 = arith.constant 0 : i32
    return %arg0, %c0_i32, %c0_i32_0 : i32, i32, i32
  }
}

module attributes {stable_mosaic.version = 11 : i64} {
  func.func @_attn_out_ln_kernel(%arg0: i32, %arg1: memref<16x32xbf16, #tpu.memory_space<vmem>>, %arg2: memref<32x32xbf16, #tpu.memory_space<vmem>>, %arg3: memref<1x32xf32, #tpu.memory_space<vmem>>, %arg4: memref<16x32xf32, #tpu.memory_space<vmem>>, %arg5: memref<1x32xf32, #tpu.memory_space<vmem>>, %arg6: memref<1x32xf32, #tpu.memory_space<vmem>>, %arg7: memref<16x32xf32, #tpu.memory_space<vmem>>) attributes {dimension_semantics = [#tpu.dimension_semantics<parallel>], iteration_bounds = array<i64: 1>, scalar_prefetch = 0 : i64, scratch_operands = 0 : i64, tpu.core_type = #tpu.core_type<tc>, window_params = [{transform_indices = @transform_0, window_bounds = array<i64: 16, 32>}, {pipeline_mode = #tpu.pipeline_mode<synchronous>, transform_indices = @transform_1, window_bounds = array<i64: 32, 32>}, {pipeline_mode = #tpu.pipeline_mode<synchronous>, transform_indices = @transform_2, window_bounds = array<i64: 1, 32>}, {transform_indices = @transform_3, window_bounds = array<i64: 16, 32>}, {pipeline_mode = #tpu.pipeline_mode<synchronous>, transform_indices = @transform_4, window_bounds = array<i64: 1, 32>}, {pipeline_mode = #tpu.pipeline_mode<synchronous>, transform_indices = @transform_5, window_bounds = array<i64: 1, 32>}, {transform_indices = @transform_6, window_bounds = array<i64: 16, 32>}]} {
    %c0 = arith.constant 0 : index
    %c0_0 = arith.constant 0 : index
    %0 = vector.load %arg1[%c0, %c0_0] : memref<16x32xbf16, #tpu.memory_space<vmem>>, vector<16x32xbf16>
    %c0_1 = arith.constant 0 : index
    %c0_2 = arith.constant 0 : index
    %1 = vector.load %arg2[%c0_1, %c0_2] : memref<32x32xbf16, #tpu.memory_space<vmem>>, vector<32x32xbf16>
    %cst = arith.constant dense<0.000000e+00> : vector<16x32xf32>
    %2 = tpu.matmul %0, %1, %cst {dimension_numbers = #tpu.dot_dimension_numbers<[1], [0], [0], [1], [0, 0, 1, 1], [], []>} : vector<16x32xbf16>, vector<32x32xbf16>, vector<16x32xf32> -> vector<16x32xf32>
    %c0_3 = arith.constant 0 : index
    %c0_4 = arith.constant 0 : index
    %3 = vector.load %arg3[%c0_3, %c0_4] : memref<1x32xf32, #tpu.memory_space<vmem>>, vector<1x32xf32>
    %4 = vector.broadcast %3 : vector<1x32xf32> to vector<16x32xf32>
    %5 = arith.addf %2, %4 : vector<16x32xf32>
    %c0_5 = arith.constant 0 : index
    %c0_6 = arith.constant 0 : index
    %6 = vector.load %arg4[%c0_5, %c0_6] : memref<16x32xf32, #tpu.memory_space<vmem>>, vector<16x32xf32>
    %7 = arith.addf %5, %6 : vector<16x32xf32>
    %c0_7 = arith.constant 0 : index
    %c0_8 = arith.constant 0 : index
    %8 = vector.load %arg5[%c0_7, %c0_8] : memref<1x32xf32, #tpu.memory_space<vmem>>, vector<1x32xf32>
    %c0_9 = arith.constant 0 : index
    %c0_10 = arith.constant 0 : index
    %9 = vector.load %arg6[%c0_9, %c0_10] : memref<1x32xf32, #tpu.memory_space<vmem>>, vector<1x32xf32>
    %cst_11 = arith.constant dense<0.000000e+00> : vector<16xf32>
    %10 = vector.multi_reduction <add>, %7, %cst_11 [1] : vector<16x32xf32> to vector<16xf32>
    %11 = vector.shape_cast %10 : vector<16xf32> to vector<16x1xf32>
    %cst_12 = arith.constant 3.200000e+01 : f32
    %12 = vector.broadcast %cst_12 : f32 to vector<16x1xf32>
    %13 = arith.divf %11, %12 : vector<16x1xf32>
    %14 = vector.broadcast %13 : vector<16x1xf32> to vector<16x32xf32>
    %15 = arith.subf %7, %14 : vector<16x32xf32>
    %16 = arith.mulf %15, %15 : vector<16x32xf32>
    %cst_13 = arith.constant dense<0.000000e+00> : vector<16xf32>
    %17 = vector.multi_reduction <add>, %16, %cst_13 [1] : vector<16x32xf32> to vector<16xf32>
    %18 = vector.shape_cast %17 : vector<16xf32> to vector<16x1xf32>
    %cst_14 = arith.constant 3.200000e+01 : f32
    %19 = vector.broadcast %cst_14 : f32 to vector<16x1xf32>
    %20 = arith.divf %18, %19 : vector<16x1xf32>
    %cst_15 = arith.constant 9.99999996E-13 : f32
    %21 = vector.broadcast %cst_15 : f32 to vector<16x1xf32>
    %22 = arith.addf %20, %21 : vector<16x1xf32>
    %23 = math.rsqrt %22 : vector<16x1xf32>
    %24 = vector.broadcast %23 : vector<16x1xf32> to vector<16x32xf32>
    %25 = arith.mulf %15, %24 : vector<16x32xf32>
    %26 = vector.broadcast %8 : vector<1x32xf32> to vector<16x32xf32>
    %27 = arith.mulf %25, %26 : vector<16x32xf32>
    %28 = vector.broadcast %9 : vector<1x32xf32> to vector<16x32xf32>
    %29 = arith.addf %27, %28 : vector<16x32xf32>
    %c0_16 = arith.constant 0 : index
    %c0_17 = arith.constant 0 : index
    %30 = vector.load %arg7[%c0_16, %c0_17] : memref<16x32xf32, #tpu.memory_space<vmem>>, vector<16x32xf32>
    tpu.vector_store %arg7[%c0_16, %c0_17], %29 {strides = array<i32>} : memref<16x32xf32, #tpu.memory_space<vmem>>, vector<16x32xf32>,
    return
  }
  func.func @transform_0(%arg0: i32) -> (i32, i32) {
    %c0_i32 = arith.constant 0 : i32
    %c0_i32_0 = arith.constant 0 : i32
    return %arg0, %c0_i32 : i32, i32
  }
  func.func @transform_1(%arg0: i32) -> (i32, i32) {
    %c0_i32 = arith.constant 0 : i32
    %c0_i32_0 = arith.constant 0 : i32
    %c0_i32_1 = arith.constant 0 : i32
    return %c0_i32, %c0_i32_0 : i32, i32
  }
  func.func @transform_2(%arg0: i32) -> (i32, i32) {
    %c0_i32 = arith.constant 0 : i32
    %c0_i32_0 = arith.constant 0 : i32
    %c0_i32_1 = arith.constant 0 : i32
    return %c0_i32, %c0_i32_0 : i32, i32
  }
  func.func @transform_3(%arg0: i32) -> (i32, i32) {
    %c0_i32 = arith.constant 0 : i32
    %c0_i32_0 = arith.constant 0 : i32
    return %arg0, %c0_i32 : i32, i32
  }
  func.func @transform_4(%arg0: i32) -> (i32, i32) {
    %c0_i32 = arith.constant 0 : i32
    %c0_i32_0 = arith.constant 0 : i32
    %c0_i32_1 = arith.constant 0 : i32
    return %c0_i32, %c0_i32_0 : i32, i32
  }
  func.func @transform_5(%arg0: i32) -> (i32, i32) {
    %c0_i32 = arith.constant 0 : i32
    %c0_i32_0 = arith.constant 0 : i32
    %c0_i32_1 = arith.constant 0 : i32
    return %c0_i32, %c0_i32_0 : i32, i32
  }
  func.func @transform_6(%arg0: i32) -> (i32, i32) {
    %c0_i32 = arith.constant 0 : i32
    %c0_i32_0 = arith.constant 0 : i32
    return %arg0, %c0_i32 : i32, i32
  }
}

module attributes {stable_mosaic.version = 11 : i64} {
  func.func @_ffn_ln_kernel(%arg0: i32, %arg1: memref<16x32xf32, #tpu.memory_space<vmem>>, %arg2: memref<32x64xbf16, #tpu.memory_space<vmem>>, %arg3: memref<1x64xf32, #tpu.memory_space<vmem>>, %arg4: memref<64x32xbf16, #tpu.memory_space<vmem>>, %arg5: memref<1x32xf32, #tpu.memory_space<vmem>>, %arg6: memref<1x32xf32, #tpu.memory_space<vmem>>, %arg7: memref<1x32xf32, #tpu.memory_space<vmem>>, %arg8: memref<16x32xf32, #tpu.memory_space<vmem>>) attributes {dimension_semantics = [#tpu.dimension_semantics<parallel>], iteration_bounds = array<i64: 1>, scalar_prefetch = 0 : i64, scratch_operands = 0 : i64, tpu.core_type = #tpu.core_type<tc>, window_params = [{transform_indices = @transform_0, window_bounds = array<i64: 16, 32>}, {pipeline_mode = #tpu.pipeline_mode<synchronous>, transform_indices = @transform_1, window_bounds = array<i64: 32, 64>}, {pipeline_mode = #tpu.pipeline_mode<synchronous>, transform_indices = @transform_2, window_bounds = array<i64: 1, 64>}, {pipeline_mode = #tpu.pipeline_mode<synchronous>, transform_indices = @transform_3, window_bounds = array<i64: 64, 32>}, {pipeline_mode = #tpu.pipeline_mode<synchronous>, transform_indices = @transform_4, window_bounds = array<i64: 1, 32>}, {pipeline_mode = #tpu.pipeline_mode<synchronous>, transform_indices = @transform_5, window_bounds = array<i64: 1, 32>}, {pipeline_mode = #tpu.pipeline_mode<synchronous>, transform_indices = @transform_6, window_bounds = array<i64: 1, 32>}, {transform_indices = @transform_7, window_bounds = array<i64: 16, 32>}]} {
    %c0 = arith.constant 0 : index
    %c0_0 = arith.constant 0 : index
    %0 = vector.load %arg1[%c0, %c0_0] : memref<16x32xf32, #tpu.memory_space<vmem>>, vector<16x32xf32>
    %1 = arith.truncf %0 : vector<16x32xf32> to vector<16x32xbf16>
    %c0_1 = arith.constant 0 : index
    %c0_2 = arith.constant 0 : index
    %2 = vector.load %arg2[%c0_1, %c0_2] : memref<32x64xbf16, #tpu.memory_space<vmem>>, vector<32x64xbf16>
    %cst = arith.constant dense<0.000000e+00> : vector<16x64xf32>
    %3 = tpu.matmul %1, %2, %cst {dimension_numbers = #tpu.dot_dimension_numbers<[1], [0], [0], [1], [0, 0, 1, 1], [], []>} : vector<16x32xbf16>, vector<32x64xbf16>, vector<16x64xf32> -> vector<16x64xf32>
    %c0_3 = arith.constant 0 : index
    %c0_4 = arith.constant 0 : index
    %4 = vector.load %arg3[%c0_3, %c0_4] : memref<1x64xf32, #tpu.memory_space<vmem>>, vector<1x64xf32>
    %5 = vector.broadcast %4 : vector<1x64xf32> to vector<16x64xf32>
    %6 = arith.addf %3, %5 : vector<16x64xf32>
    %cst_5 = arith.constant 5.000000e-01 : f32
    %7 = vector.broadcast %cst_5 : f32 to vector<16x64xf32>
    %8 = arith.mulf %7, %6 : vector<16x64xf32>
    %cst_6 = arith.constant 4.471500e-02 : f32
    %9 = vector.broadcast %cst_6 : f32 to vector<16x64xf32>
    %10 = arith.mulf %9, %6 : vector<16x64xf32>
    %11 = arith.mulf %10, %6 : vector<16x64xf32>
    %12 = arith.mulf %11, %6 : vector<16x64xf32>
    %13 = arith.addf %6, %12 : vector<16x64xf32>
    %cst_7 = arith.constant 0.797884583 : f32
    %14 = vector.broadcast %cst_7 : f32 to vector<16x64xf32>
    %15 = arith.mulf %14, %13 : vector<16x64xf32>
    %16 = math.tanh %15 : vector<16x64xf32>
    %cst_8 = arith.constant 1.000000e+00 : f32
    %17 = vector.broadcast %cst_8 : f32 to vector<16x64xf32>
    %18 = arith.addf %17, %16 : vector<16x64xf32>
    %19 = arith.mulf %8, %18 : vector<16x64xf32>
    %20 = arith.truncf %19 : vector<16x64xf32> to vector<16x64xbf16>
    %c0_9 = arith.constant 0 : index
    %c0_10 = arith.constant 0 : index
    %21 = vector.load %arg4[%c0_9, %c0_10] : memref<64x32xbf16, #tpu.memory_space<vmem>>, vector<64x32xbf16>
    %cst_11 = arith.constant dense<0.000000e+00> : vector<16x32xf32>
    %22 = tpu.matmul %20, %21, %cst_11 {dimension_numbers = #tpu.dot_dimension_numbers<[1], [0], [0], [1], [0, 0, 1, 1], [], []>} : vector<16x64xbf16>, vector<64x32xbf16>, vector<16x32xf32> -> vector<16x32xf32>
    %c0_12 = arith.constant 0 : index
    %c0_13 = arith.constant 0 : index
    %23 = vector.load %arg5[%c0_12, %c0_13] : memref<1x32xf32, #tpu.memory_space<vmem>>, vector<1x32xf32>
    %24 = vector.broadcast %23 : vector<1x32xf32> to vector<16x32xf32>
    %25 = arith.addf %22, %24 : vector<16x32xf32>
    %26 = arith.addf %25, %0 : vector<16x32xf32>
    %c0_14 = arith.constant 0 : index
    %c0_15 = arith.constant 0 : index
    %27 = vector.load %arg6[%c0_14, %c0_15] : memref<1x32xf32, #tpu.memory_space<vmem>>, vector<1x32xf32>
    %c0_16 = arith.constant 0 : index
    %c0_17 = arith.constant 0 : index
    %28 = vector.load %arg7[%c0_16, %c0_17] : memref<1x32xf32, #tpu.memory_space<vmem>>, vector<1x32xf32>
    %cst_18 = arith.constant dense<0.000000e+00> : vector<16xf32>
    %29 = vector.multi_reduction <add>, %26, %cst_18 [1] : vector<16x32xf32> to vector<16xf32>
    %30 = vector.shape_cast %29 : vector<16xf32> to vector<16x1xf32>
    %cst_19 = arith.constant 3.200000e+01 : f32
    %31 = vector.broadcast %cst_19 : f32 to vector<16x1xf32>
    %32 = arith.divf %30, %31 : vector<16x1xf32>
    %33 = vector.broadcast %32 : vector<16x1xf32> to vector<16x32xf32>
    %34 = arith.subf %26, %33 : vector<16x32xf32>
    %35 = arith.mulf %34, %34 : vector<16x32xf32>
    %cst_20 = arith.constant dense<0.000000e+00> : vector<16xf32>
    %36 = vector.multi_reduction <add>, %35, %cst_20 [1] : vector<16x32xf32> to vector<16xf32>
    %37 = vector.shape_cast %36 : vector<16xf32> to vector<16x1xf32>
    %cst_21 = arith.constant 3.200000e+01 : f32
    %38 = vector.broadcast %cst_21 : f32 to vector<16x1xf32>
    %39 = arith.divf %37, %38 : vector<16x1xf32>
    %cst_22 = arith.constant 9.99999996E-13 : f32
    %40 = vector.broadcast %cst_22 : f32 to vector<16x1xf32>
    %41 = arith.addf %39, %40 : vector<16x1xf32>
    %42 = math.rsqrt %41 : vector<16x1xf32>
    %43 = vector.broadcast %42 : vector<16x1xf32> to vector<16x32xf32>
    %44 = arith.mulf %34, %43 : vector<16x32xf32>
    %45 = vector.broadcast %27 : vector<1x32xf32> to vector<16x32xf32>
    %46 = arith.mulf %44, %45 : vector<16x32xf32>
    %47 = vector.broadcast %28 : vector<1x32xf32> to vector<16x32xf32>
    %48 = arith.addf %46, %47 : vector<16x32xf32>
    %c0_23 = arith.constant 0 : index
    %c0_24 = arith.constant 0 : index
    %49 = vector.load %arg8[%c0_23, %c0_24] : memref<16x32xf32, #tpu.memory_space<vmem>>, vector<16x32xf32>
    tpu.vector_store %arg8[%c0_23, %c0_24], %48 {strides = array<i32>} : memref<16x32xf32, #tpu.memory_space<vmem>>, vector<16x32xf32>,
    return
  }
  func.func @transform_0(%arg0: i32) -> (i32, i32) {
    %c0_i32 = arith.constant 0 : i32
    %c0_i32_0 = arith.constant 0 : i32
    return %arg0, %c0_i32 : i32, i32
  }
  func.func @transform_1(%arg0: i32) -> (i32, i32) {
    %c0_i32 = arith.constant 0 : i32
    %c0_i32_0 = arith.constant 0 : i32
    %c0_i32_1 = arith.constant 0 : i32
    return %c0_i32, %c0_i32_0 : i32, i32
  }
  func.func @transform_2(%arg0: i32) -> (i32, i32) {
    %c0_i32 = arith.constant 0 : i32
    %c0_i32_0 = arith.constant 0 : i32
    %c0_i32_1 = arith.constant 0 : i32
    return %c0_i32, %c0_i32_0 : i32, i32
  }
  func.func @transform_3(%arg0: i32) -> (i32, i32) {
    %c0_i32 = arith.constant 0 : i32
    %c0_i32_0 = arith.constant 0 : i32
    %c0_i32_1 = arith.constant 0 : i32
    return %c0_i32, %c0_i32_0 : i32, i32
  }
  func.func @transform_4(%arg0: i32) -> (i32, i32) {
    %c0_i32 = arith.constant 0 : i32
    %c0_i32_0 = arith.constant 0 : i32
    %c0_i32_1 = arith.constant 0 : i32
    return %c0_i32, %c0_i32_0 : i32, i32
  }
  func.func @transform_5(%arg0: i32) -> (i32, i32) {
    %c0_i32 = arith.constant 0 : i32
    %c0_i32_0 = arith.constant 0 : i32
    %c0_i32_1 = arith.constant 0 : i32
    return %c0_i32, %c0_i32_0 : i32, i32
  }
  func.func @transform_6(%arg0: i32) -> (i32, i32) {
    %c0_i32 = arith.constant 0 : i32
    %c0_i32_0 = arith.constant 0 : i32
    %c0_i32_1 = arith.constant 0 : i32
    return %c0_i32, %c0_i32_0 : i32, i32
  }
  func.func @transform_7(%arg0: i32) -> (i32, i32) {
    %c0_i32 = arith.constant 0 : i32
    %c0_i32_0 = arith.constant 0 : i32
    return %arg0, %c0_i32 : i32, i32
  }
}

module attributes {stable_mosaic.version = 11 : i64} {
  func.func @_dense_kernel(%arg0: i32, %arg1: memref<2x32xf32, #tpu.memory_space<vmem>>, %arg2: memref<32x32xbf16, #tpu.memory_space<vmem>>, %arg3: memref<1x32xf32, #tpu.memory_space<vmem>>, %arg4: memref<2x32xf32, #tpu.memory_space<vmem>>) attributes {dimension_semantics = [#tpu.dimension_semantics<parallel>], iteration_bounds = array<i64: 1>, scalar_prefetch = 0 : i64, scratch_operands = 0 : i64, tpu.core_type = #tpu.core_type<tc>, window_params = [{transform_indices = @transform_0, window_bounds = array<i64: 2, 32>}, {pipeline_mode = #tpu.pipeline_mode<synchronous>, transform_indices = @transform_1, window_bounds = array<i64: 32, 32>}, {pipeline_mode = #tpu.pipeline_mode<synchronous>, transform_indices = @transform_2, window_bounds = array<i64: 1, 32>}, {transform_indices = @transform_3, window_bounds = array<i64: 2, 32>}]} {
    %c0 = arith.constant 0 : index
    %c0_0 = arith.constant 0 : index
    %0 = vector.load %arg1[%c0, %c0_0] : memref<2x32xf32, #tpu.memory_space<vmem>>, vector<2x32xf32>
    %1 = arith.truncf %0 : vector<2x32xf32> to vector<2x32xbf16>
    %c0_1 = arith.constant 0 : index
    %c0_2 = arith.constant 0 : index
    %2 = vector.load %arg2[%c0_1, %c0_2] : memref<32x32xbf16, #tpu.memory_space<vmem>>, vector<32x32xbf16>
    %cst = arith.constant dense<0.000000e+00> : vector<2x32xf32>
    %3 = tpu.matmul %1, %2, %cst {dimension_numbers = #tpu.dot_dimension_numbers<[1], [0], [0], [1], [0, 0, 1, 1], [], []>} : vector<2x32xbf16>, vector<32x32xbf16>, vector<2x32xf32> -> vector<2x32xf32>
    %c0_3 = arith.constant 0 : index
    %c0_4 = arith.constant 0 : index
    %4 = vector.load %arg3[%c0_3, %c0_4] : memref<1x32xf32, #tpu.memory_space<vmem>>, vector<1x32xf32>
    %5 = vector.broadcast %4 : vector<1x32xf32> to vector<2x32xf32>
    %6 = arith.addf %3, %5 : vector<2x32xf32>
    %7 = math.tanh %6 : vector<2x32xf32>
    %c0_5 = arith.constant 0 : index
    %c0_6 = arith.constant 0 : index
    %8 = vector.load %arg4[%c0_5, %c0_6] : memref<2x32xf32, #tpu.memory_space<vmem>>, vector<2x32xf32>
    tpu.vector_store %arg4[%c0_5, %c0_6], %7 {strides = array<i32>} : memref<2x32xf32, #tpu.memory_space<vmem>>, vector<2x32xf32>,
    return
  }
  func.func @transform_0(%arg0: i32) -> (i32, i32) {
    %c0_i32 = arith.constant 0 : i32
    %c0_i32_0 = arith.constant 0 : i32
    return %arg0, %c0_i32 : i32, i32
  }
  func.func @transform_1(%arg0: i32) -> (i32, i32) {
    %c0_i32 = arith.constant 0 : i32
    %c0_i32_0 = arith.constant 0 : i32
    %c0_i32_1 = arith.constant 0 : i32
    return %c0_i32, %c0_i32_0 : i32, i32
  }
  func.func @transform_2(%arg0: i32) -> (i32, i32) {
    %c0_i32 = arith.constant 0 : i32
    %c0_i32_0 = arith.constant 0 : i32
    %c0_i32_1 = arith.constant 0 : i32
    return %c0_i32, %c0_i32_0 : i32, i32
  }
  func.func @transform_3(%arg0: i32) -> (i32, i32) {
    %c0_i32 = arith.constant 0 : i32
    %c0_i32_0 = arith.constant 0 : i32
    return %arg0, %c0_i32 : i32, i32
  }
}

</mosaic_0001>

<llo_original>
// kernel: bert_encoder_forward.10
$region0: #{bert_encoder_forward.10}
  #allocation0 [shape = 'u32[]', space=smem, size = 0x4, offset = 0x4, fixed_abs, tag = 'smem constant byte address 0x4 - core index']
  #allocation1 [shape = 'u32[72,128]{1,0:T(1,128)}', space=vmem, size = 0x9000, scoped, tag = 'internal scratch']
  %s0 = inlined_call_operand.vmem [shape: f32[16,32], index: 0, kind: input, shape index: {}]
  %s1 = inlined_call_operand.vmem [shape: f32[1,32], index: 1, kind: input, shape index: {}]
  %s2 = inlined_call_operand.vmem [shape: f32[1,32], index: 2, kind: input, shape index: {}]
  %s3 = inlined_call_operand.vmem [shape: f32[16,32], index: 3, kind: output, shape index: {}]
  %s4 = sld [smem:[#allocation0]]
  $region22: #{bert_encoder_forward.10} parent=0
    _
  %s6 = ssub.s32 1, %s4
  %s7 = scalar_select 0, %s6, %s4
  // Predicated region
  $region2: #{bert_encoder_forward.10} parent=0 // pred_check
    _
  $region3: #{bert_encoder_forward.10} parent=0 // pred_check_branch
    %9 = sbr.rel (0) target = $region5
  $region4: #{bert_encoder_forward.10} parent=0 // pred_region
    _
  $region5: #{bert_encoder_forward.10} parent=0 // pred_fallthru
    _
  // Predicated region
  $region6: #{bert_encoder_forward.10} parent=0 // pred_check
    _
  $region7: #{bert_encoder_forward.10} parent=0 // pred_check_branch
    %11 = sbr.rel (0) target = $region9
  $region8: #{bert_encoder_forward.10} parent=0 // pred_region
    _
  $region9: #{bert_encoder_forward.10} parent=0 // pred_fallthru
    _
  // Predicated region
  $region10: #{bert_encoder_forward.10} parent=0 // pred_check
    _
  $region11: #{bert_encoder_forward.10} parent=0 // pred_check_branch
    %13 = sbr.rel (0) target = $region13
  $region12: #{bert_encoder_forward.10} parent=0 // pred_region
    _
  $region13: #{bert_encoder_forward.10} parent=0 // pred_fallthru
    _
  %v14 = vld [vmem:[%s0] sm:$0xff]
  %v15 = vld [vmem:[%s0 + $0x8] sm:$0xff]
  %v16 = vld [vmem:[%s1] sm:$0x1]
  %v17 = vld [vmem:[%s2] sm:$0x1]
  %vm18 = vcmask 261120
  %v19 = vsel %vm18, %v14, 0.0
  %20 = vadd.xlane.f32.xlu0 %v19
  %v21 = vpop.xlane.xlu0 %20
  %v22 = vsel %vm18, %v15, 0.0
  %23 = vadd.xlane.f32.xlu0 %v22
  %v24 = vpop.xlane.xlu0 %23
  %v25 = vrcp.pop 32.0
  %v26 = vmul.f32 32.0, %v25
  %v27 = vsub.f32 1.0, %v26
  %v28 = vmul.f32 %v25, %v27
  %v29 = vadd.f32 %v25, %v28
  %vm30 = vweird.f32 %v25
  %v31 = vsel %vm30, %v25, %v29
  %v32 = vmul.f32 %v21, %v31
  %v33 = vmul.f32 %v24, %v31
  %v34 = vsub.f32 %v14, %v32
  %v35 = vsub.f32 %v15, %v33
  %v36 = vmul.f32 %v34, %v34
  %v37 = vmul.f32 %v35, %v35
  %v38 = vsel %vm18, %v36, 0.0
  %39 = vadd.xlane.f32.xlu0 %v38
  %v40 = vpop.xlane.xlu0 %39
  %v41 = vsel %vm18, %v37, 0.0
  %42 = vadd.xlane.f32.xlu0 %v41
  %v43 = vpop.xlane.xlu0 %42
  %v44 = vmul.f32 %v40, %v31
  %v45 = vmul.f32 %v43, %v31
  %v46 = vadd.f32 %v44, 1e-12
  %v47 = vadd.f32 %v45, 1e-12
  %v48 = vrsqrt.pop %v46
  %v49 = vmul.f32 %v48, %v46
  %v50 = vmul.f32 %v49, %v48
  %v51 = vmul.f32 0.5, %v50
  %v52 = vsub.f32 1.5, %v51
  %v53 = vmul.f32 %v48, %v52
  %vm54 = vweird.f32 %v46
  %vm55 = vweird.f32 %v48
  %vm56 = vmor %vm54, %vm55
  %v57 = vsel %vm56, %v48, %v53
  %v58 = vrsqrt.pop %v47
  %v59 = vmul.f32 %v58, %v47
  %v60 = vmul.f32 %v59, %v58
  %v61 = vmul.f32 0.5, %v60
  %v62 = vsub.f32 1.5, %v61
  %v63 = vmul.f32 %v58, %v62
  %vm64 = vweird.f32 %v47
  %vm65 = vweird.f32 %v58
  %vm66 = vmor %vm64, %vm65
  %v67 = vsel %vm66, %v58, %v63
  %v68 = vmul.f32 %v34, %v57
  %v69 = vmul.f32 %v35, %v67
  %v71 = vperm.slane %v16, 0
  %v73 = vmul.f32 %v68, %v71
  %v74 = vmul.f32 %v69, %v71
  %v76 = vperm.slane %v17, 0
  %v78 = vadd.f32 %v73, %v76
  %v79 = vadd.f32 %v74, %v76
  %80 = vst.msk [vmem:[%s3] sm:$0xff] %vm18, %v78
  %81 = vst.msk [vmem:[%s3 + $0x8] sm:$0xff] %vm18, %v79
  // Predicated region
  $region14: #{bert_encoder_forward.10} parent=0 // pred_check
    _
  $region15: #{bert_encoder_forward.10} parent=0 // pred_check_branch
    %83 = sbr.rel (0) target = $region17
  $region16: #{bert_encoder_forward.10} parent=0 // pred_region
    _
  $region17: #{bert_encoder_forward.10} parent=0 // pred_fallthru
    _
  // Predicated region
  $region18: #{bert_encoder_forward.10} parent=0 // pred_check
    _
  $region19: #{bert_encoder_forward.10} parent=0 // pred_check_branch
    %85 = sbr.rel (0) target = $region21
  $region20: #{bert_encoder_forward.10} parent=0 // pred_region
    _
  $region21: #{bert_encoder_forward.10} parent=0 // pred_fallthru
    _

// kernel: bert_encoder_forward.11
$region0: #{bert_encoder_forward.11}
  #allocation0 [shape = 'u32[]', space=smem, size = 0x4, offset = 0x4, fixed_abs, tag = 'smem constant byte address 0x4 - core index']
  #allocation1 [shape = 'u32[72,128]{1,0:T(1,128)}', space=vmem, size = 0x9000, scoped, tag = 'internal scratch']
  %s0 = inlined_call_operand.vmem [shape: f32[16,32], index: 0, kind: input, shape index: {}]
  %s1 = inlined_call_operand.vmem [shape: bf16[32,96], index: 1, kind: input, shape index: {}]
  %s2 = inlined_call_operand.vmem [shape: f32[1,96], index: 2, kind: input, shape index: {}]
  %s3 = inlined_call_operand.vmem [shape: bf16[16,96], index: 3, kind: output, shape index: {}]
  %s4 = sld [smem:[#allocation0]]
  $region22: #{bert_encoder_forward.11} parent=0
    _
  %s6 = ssub.s32 1, %s4
  %s7 = scalar_select 0, %s6, %s4
  // Predicated region
  $region2: #{bert_encoder_forward.11} parent=0 // pred_check
    _
  $region3: #{bert_encoder_forward.11} parent=0 // pred_check_branch
    %9 = sbr.rel (0) target = $region5
  $region4: #{bert_encoder_forward.11} parent=0 // pred_region
    _
  $region5: #{bert_encoder_forward.11} parent=0 // pred_fallthru
    _
  // Predicated region
  $region6: #{bert_encoder_forward.11} parent=0 // pred_check
    _
  $region7: #{bert_encoder_forward.11} parent=0 // pred_check_branch
    %11 = sbr.rel (0) target = $region9
  $region8: #{bert_encoder_forward.11} parent=0 // pred_region
    _
  $region9: #{bert_encoder_forward.11} parent=0 // pred_fallthru
    _
  // Predicated region
  $region10: #{bert_encoder_forward.11} parent=0 // pred_check
    _
  $region11: #{bert_encoder_forward.11} parent=0 // pred_check_branch
    %13 = sbr.rel (0) target = $region13
  $region12: #{bert_encoder_forward.11} parent=0 // pred_region
    _
  $region13: #{bert_encoder_forward.11} parent=0 // pred_fallthru
    _
  %v15 = vld [vmem:[%s0] sm:$0xff]
  %v16 = vld [vmem:[%s0 + $0x8] sm:$0xff]
  %v17 = vpack.c.bf16 %v16, %v15
  %v18 = vld [vmem:[%s1] sm:$0xf]
  %v19 = vld [vmem:[%s1 + $0x4] sm:$0xf]
  %v20 = vld [vmem:[%s1 + $0x8] sm:$0xf]
  %v21 = vld [vmem:[%s1 + $0xc] sm:$0xf]
  %v22 = vld [vmem:[%s2] sm:$0x1]
  %v24 = vperm.slane %v22, 0
  %v30 = vunpack.c.l.b16 %v18
  %v31 = vunpack.c.l.b16 %v19
  %v32 = vunpack.c.l.b16 %v20
  %v33 = vunpack.c.l.b16 %v21
  %v34 = vpack.c.b16 %v31, %v30
  %v35 = vpack.c.b16 %v33, %v32
  %vm38 = vcmask 261120
  %v40 = vsel %vm38, %v17, 0
  %42 = vmatpush.bf16.msra.mxu0 0
  %43 = vmatpush.bf16.msra.mxu0 0
  %44 = vmatpush.bf16.msra.mxu0 0
  %45 = vmatpush.bf16.msra.mxu0 0
  %46 = vmatpush.bf16.msra.mxu0 0
  %47 = vmatpush.bf16.msra.mxu0 0
  %48 = vmatpush.bf16.msra.mxu0 %v35
  %49 = vmatpush.bf16.msra.mxu0 %v34
  %50 = vmatmul.bf16.gmra.mxu0 %v40
  %v51 = vpop.f32.mrf.mxu0
  %v52 = vadd.f32 %v24, %v51
  %v53 = vpop.f32.mrf.mxu0
  %v54 = vadd.f32 %v24, %v53
  %55 = vdwg.mxu0
  %v56 = vpack.c.bf16 %v52, %v52
  %v57 = vpack.c.bf16 %v54, %v54
  %vm58 = vcmask 781312
  %59 = vst.msk [vmem:[%s3] sm:$0xf] %vm58, %v56
  %60 = vst.msk [vmem:[%s3 + $0x4] sm:$0xf] %vm58, %v57
  // Predicated region
  $region14: #{bert_encoder_forward.11} parent=0 // pred_check
    _
  $region15: #{bert_encoder_forward.11} parent=0 // pred_check_branch
    %62 = sbr.rel (0) target = $region17
  $region16: #{bert_encoder_forward.11} parent=0 // pred_region
    _
  $region17: #{bert_encoder_forward.11} parent=0 // pred_fallthru
    _
  // Predicated region
  $region18: #{bert_encoder_forward.11} parent=0 // pred_check
    _
  $region19: #{bert_encoder_forward.11} parent=0 // pred_check_branch
    %64 = sbr.rel (0) target = $region21
  $region20: #{bert_encoder_forward.11} parent=0 // pred_region
    _
  $region21: #{bert_encoder_forward.11} parent=0 // pred_fallthru
    _

// kernel: bert_encoder_forward.12
$region0: #{bert_encoder_forward.12}
  #allocation0 [shape = 'u32[]', space=smem, size = 0x4, offset = 0x4, fixed_abs, tag = 'smem constant byte address 0x4 - core index']
  #allocation1 [shape = 'u32[72,128]{1,0:T(1,128)}', space=vmem, size = 0x9000, scoped, tag = 'internal scratch']
  %s0 = inlined_call_operand.vmem [shape: bf16[2,8,96], index: 0, kind: input, shape index: {}]
  %s1 = inlined_call_operand.vmem [shape: f32[2,1,8], index: 1, kind: input, shape index: {}]
  %s2 = inlined_call_operand.vmem [shape: bf16[2,8,32], index: 2, kind: output, shape index: {}]
  %s3 = sld [smem:[#allocation0]]
  $region41: #{bert_encoder_forward.12} parent=0
    _
  %s5 = ssub.s32 1, %s3
  %s6 = scalar_select 0, %s5, %s3
  loop: start=0, step=1, limit=4
  $region2: #{bert_encoder_forward.12} parent=0 // loop_pre_header
    _
  $region3: #{bert_encoder_forward.12} parent=0 // loop_header
    %s8 = sphi 0, %s12
    %p9 = scmp.ge.s32.totalorder %s8, 4
    %s18 = sphi 0, %s20
    %s21 = sphi 0, %s18
    %s22 = sphi 0, %s21
    %s38 = sphi 0, %s22
    %s44 = sphi 0, %s46
    %s47 = sphi 0, %s44
    %s48 = sphi 0, %s47
    %s64 = sphi 0, %s48
    %s70 = sphi 0, %s72
    %s73 = sphi 0, %s70
    %s74 = sphi 0, %s73
    %s90 = sphi 0, %s74
  $region4: #{bert_encoder_forward.12} parent=0 // loop_header_branch
    %11 = sbr.rel (%p9) target = $region8
  $region5: #{bert_encoder_forward.12} parent=0 // loop_body
    %s13 = ssub.s32 %s8, 1
    %s14 = ssub.s32 %s8, 2
    %s15 = sadd.s32 %s8, 1
    %s16 = ssub.s32 %s8, %s15
    %p17 = scmp.eq.s32.totalorder %s16, 0
    %s19 = sadd.s32 %s18, 1
    %s20 = scalar_select %p17, %s18, %s19
    %p23 = pneg %p17
    %p24 = scmp.eq.s32.totalorder %s8, 1
    %p25 = por %p23, %p24
    %p26 = scmp.ne.s32.totalorder %s18, %s21
    %p27 = scmp.eq.s32.totalorder %s8, 0
    %p28 = por %p26, %p27
    %p29 = scmp.ne.s32.totalorder %s18, %s21
    %p30 = scmp.eq.s32.totalorder %s13, 1
    %p31 = por %p29, %p30
    %p32 = scmp.ne.s32.totalorder %s21, %s22
    %p33 = scmp.eq.s32.totalorder %s13, 0
    %p34 = por %p32, %p33
    %p35 = scmp.ne.s32.totalorder %s21, %s22
    %p36 = scmp.eq.s32.totalorder %s14, 1
    %p37 = por %p35, %p36
    %p39 = scmp.ne.s32.totalorder %s22, %s38
    %p40 = scmp.eq.s32.totalorder %s14, 0
    %p41 = por %p39, %p40
    %s42 = ssub.s32 %s8, %s15
    %p43 = scmp.eq.s32.totalorder %s42, 0
    %s45 = sadd.s32 %s44, 1
    %s46 = scalar_select %p43, %s44, %s45
    %p49 = pneg %p43
    %p50 = scmp.eq.s32.totalorder %s8, 1
    %p51 = por %p49, %p50
    %p52 = scmp.ne.s32.totalorder %s44, %s47
    %p53 = scmp.eq.s32.totalorder %s8, 0
    %p54 = por %p52, %p53
    %p55 = scmp.ne.s32.totalorder %s44, %s47
    %p56 = scmp.eq.s32.totalorder %s13, 1
    %p57 = por %p55, %p56
    %p58 = scmp.ne.s32.totalorder %s47, %s48
    %p59 = scmp.eq.s32.totalorder %s13, 0
    %p60 = por %p58, %p59
    %p61 = scmp.ne.s32.totalorder %s47, %s48
    %p62 = scmp.eq.s32.totalorder %s14, 1
    %p63 = por %p61, %p62
    %p65 = scmp.ne.s32.totalorder %s48, %s64
    %p66 = scmp.eq.s32.totalorder %s14, 0
    %p67 = por %p65, %p66
    %s68 = ssub.s32 %s8, %s15
    %p69 = scmp.eq.s32.totalorder %s68, 0
    %s71 = sadd.s32 %s70, 1
    %s72 = scalar_select %p69, %s70, %s71
    %p75 = pneg %p69
    %p76 = scmp.eq.s32.totalorder %s8, 1
    %p77 = por %p75, %p76
    %p78 = scmp.ne.s32.totalorder %s70, %s73
    %p79 = scmp.eq.s32.totalorder %s8, 0
    %p80 = por %p78, %p79
    %p81 = scmp.ne.s32.totalorder %s70, %s73
    %p82 = scmp.eq.s32.totalorder %s13, 1
    %p83 = por %p81, %p82
    %p84 = scmp.ne.s32.totalorder %s73, %s74
    %p85 = scmp.eq.s32.totalorder %s13, 0
    %p86 = por %p84, %p85
    %p87 = scmp.ne.s32.totalorder %s73, %s74
    %p88 = scmp.eq.s32.totalorder %s14, 1
    %p89 = por %p87, %p88
    %p91 = scmp.ne.s32.totalorder %s74, %s90
    %p92 = scmp.eq.s32.totalorder %s14, 0
    %p93 = por %p91, %p92
    %p94 = scmp.le.s32.totalorder 1, %s8
    %p95 = scmp.lt.s32.totalorder %s8, 3
    %p96 = pnand %p94, %p95
    %p97 = pneg %p96
    // Predicated region
    $region9: #{bert_encoder_forward.12} parent=5 // pred_check
      _
    $region10: #{bert_encoder_forward.12} parent=5 // pred_check_branch
      %99 = sbr.rel (%p96) target = $region12
    $region11: #{bert_encoder_forward.12} parent=5 // pred_region
      %s100 = ssub.s32 %s8, 1
    $region12: #{bert_encoder_forward.12} parent=5 // pred_fallthru
      _
    %p101 = scmp.lt.s32.totalorder %s8, 2
    // Predicated region
    $region13: #{bert_encoder_forward.12} parent=5 // pred_check
      %p102 = pneg %p101
    $region14: #{bert_encoder_forward.12} parent=5 // pred_check_branch
      %104 = sbr.rel (%p102) target = $region16
    $region15: #{bert_encoder_forward.12} parent=5 // pred_region
      // Predicated region
      $region17: #{bert_encoder_forward.12} parent=15 // pred_check
        %p105 = pneg %p28
      $region18: #{bert_encoder_forward.12} parent=15 // pred_check_branch
        %107 = sbr.rel (%p105) target = $region20
      $region19: #{bert_encoder_forward.12} parent=15 // pred_region
        %p108 = scmp.lt.s32.totalorder %s8, 1
        %s109 = scalar_select %p108, %s8, 1
        %s110 = smul.addr %s109, 4
        %s111 = scalar_lea.vmem %s0, %s110
      $region20: #{bert_encoder_forward.12} parent=15 // pred_fallthru
        _
      // Predicated region
      $region21: #{bert_encoder_forward.12} parent=15 // pred_check
        %p112 = pneg %p54
      $region22: #{bert_encoder_forward.12} parent=15 // pred_check_branch
        %114 = sbr.rel (%p112) target = $region24
      $region23: #{bert_encoder_forward.12} parent=15 // pred_region
        %p115 = scmp.lt.s32.totalorder %s8, 1
        %s116 = scalar_select %p115, %s8, 1
        %s117 = scalar_lea.vmem %s1, %s116
      $region24: #{bert_encoder_forward.12} parent=15 // pred_fallthru
        _
    $region16: #{bert_encoder_forward.12} parent=5 // pred_fallthru
      _
    %p118 = scmp.le.s32.totalorder 1, %s8
    %p119 = scmp.lt.s32.totalorder %s8, 3
    %p120 = pnand %p118, %p119
    %p121 = pneg %p120
    // Predicated region
    $region25: #{bert_encoder_forward.12} parent=5 // pred_check
      _
    $region26: #{bert_encoder_forward.12} parent=5 // pred_check_branch
      %123 = sbr.rel (%p120) target = $region28
    $region27: #{bert_encoder_forward.12} parent=5 // pred_region
      %s124 = ssub.s32 %s8, 1
      %p125 = scmp.lt.s32.totalorder %s13, 1
      %s126 = scalar_select %p125, %s13, 1
      %s127 = smul.addr %s126, 4
      %s128 = scalar_lea.vmem %s0, %s127
      %p129 = pneg %p34
      %p130 = pneg %p31
      %p131 = scmp.lt.s32.totalorder %s13, 1
      %s132 = scalar_select %p131, %s13, 1
      %s133 = scalar_lea.vmem %s1, %s132
      %p134 = pneg %p60
      %p135 = pneg %p57
      %p136 = pneg %p86
      %p137 = pneg %p83
      %p138 = scmp.lt.s32.totalorder %s13, 1
      %s139 = scalar_select %p138, %s13, 1
      %s140 = smul.addr %s139, 4
      %s141 = scalar_lea.vmem %s2, %s140
      %p142 = scmp.lt.s32.totalorder %s13, 1
      %s143 = scalar_select %p142, %s13, 1
      %s144 = smul.addr %s143, 4
      %s145 = scalar_lea.vmem %s0, %s144
      %p146 = scmp.lt.s32.totalorder %s13, 1
      %s147 = scalar_select %p146, %s13, 1
      %s148 = scalar_lea.vmem %s1, %s147
      %p149 = scmp.lt.s32.totalorder %s13, 1
      %s150 = scalar_select %p149, %s13, 1
      %s151 = smul.addr %s150, 4
      %s152 = scalar_lea.vmem %s2, %s151
      %v154 = vld [vmem:[%s145] sm:$0xf]
      %v155 = vld [vmem:[%s148] sm:$0x1]
      %v157 = vunpack.c.l.b16 %v154
      %v158 = vpack.c.b16 %v157, %v157
      %159 = vrot.lane.b32.xlu0 %v158, 96
      %v160 = vpop.permute.xlu0 %159
      %vm161 = vcmask 130048
      %v163 = vsel %vm161, %v154, 0
      %v166 = vsel %vm161, %v160, 0
      %168 = vmatpush.bf16.xpose.msra.mxu0 0
      %169 = vmatpush.bf16.xpose.msra.mxu0 0
      %170 = vmatpush.bf16.xpose.msra.mxu0 0
      %171 = vmatpush.bf16.xpose.msra.mxu0 0
      %172 = vmatpush.bf16.xpose.msra.mxu0 0
      %173 = vmatpush.bf16.xpose.msra.mxu0 0
      %174 = vmatpush.bf16.xpose.msra.mxu0 0
      %175 = vmatpush.bf16.xpose.msra.mxu0 %v166
      %176 = vmatmul.bf16.gmra.mxu0 %v163
      %v177 = vpop.f32.mrf.mxu0
      %v178 = vadd.f32 0.0, %v177
      %v179 = vpop.f32.mrf.mxu0
      %180 = vdwg.mxu0
      %v181 = vmul.f32 %v178, 0.25
      %v183 = vperm.slane %v155, 0
      %v185 = vadd.f32 %v181, %v183
      %vm186 = vcmask 64512
      %v187 = vsel %vm186, %v185, -inf
      %188 = vmax.xlane.f32.xlu0 %v187
      %v189 = vpop.xlane.xlu0 %188
      %v190 = vsub.f32 %v185, %v189
      %v191 = vmul.f32 %v190, 1.442695
      %v192 = vpow.pop %v191
      %v193 = vsel %vm186, %v192, 0.0
      %194 = vadd.xlane.f32.xlu0 %v193
      %v195 = vpop.xlane.xlu0 %194
      %v196 = vrcp.pop %v195
      %v197 = vmul.f32 %v192, %v196
      %v198 = vpack.c.bf16 %v197, %v197
      %199 = vrot.lane.b32.xlu0 %v158, 64
      %v200 = vpop.permute.xlu0 %199
      %v202 = vsel %vm186, %v198, 0
      %vm204 = vcmask 1043456
      %v206 = vsel %vm204, %v200, 0
      %208 = vmatpush.bf16.msra.mxu0 0
      %209 = vmatpush.bf16.msra.mxu0 0
      %210 = vmatpush.bf16.msra.mxu0 0
      %211 = vmatpush.bf16.msra.mxu0 0
      %212 = vmatpush.bf16.msra.mxu0 0
      %213 = vmatpush.bf16.msra.mxu0 0
      %214 = vmatpush.bf16.msra.mxu0 0
      %215 = vmatpush.bf16.msra.mxu0 %v206
      %216 = vmatmul.bf16.gmra.mxu0 %v202
      %v217 = vpop.f32.mrf.mxu0
      %v218 = vadd.f32 0.0, %v217
      %v219 = vpop.f32.mrf.mxu0
      %220 = vdwg.mxu0
      %221 = vrot.lane.b32.xlu0 %v158, 112
      %v222 = vpop.permute.xlu0 %221
      %223 = vrot.lane.b32.xlu0 %v158, 80
      %v224 = vpop.permute.xlu0 %223
      %v226 = vsel %vm161, %v222, 0
      %v229 = vsel %vm161, %v224, 0
      %231 = vmatpush.bf16.xpose.msra.mxu0 0
      %232 = vmatpush.bf16.xpose.msra.mxu0 0
      %233 = vmatpush.bf16.xpose.msra.mxu0 0
      %234 = vmatpush.bf16.xpose.msra.mxu0 0
      %235 = vmatpush.bf16.xpose.msra.mxu0 0
      %236 = vmatpush.bf16.xpose.msra.mxu0 0
      %237 = vmatpush.bf16.xpose.msra.mxu0 0
      %238 = vmatpush.bf16.xpose.msra.mxu0 %v229
      %239 = vmatmul.bf16.gmra.mxu0 %v226
      %v240 = vpop.f32.mrf.mxu0
      %v241 = vadd.f32 0.0, %v240
      %v242 = vpop.f32.mrf.mxu0
      %243 = vdwg.mxu0
      %v244 = vmul.f32 %v241, 0.25
      %v245 = vadd.f32 %v244, %v183
      %v246 = vsel %vm186, %v245, -inf
      %247 = vmax.xlane.f32.xlu0 %v246
      %v248 = vpop.xlane.xlu0 %247
      %v249 = vsub.f32 %v245, %v248
      %v250 = vmul.f32 %v249, 1.442695
      %v251 = vpow.pop %v250
      %v252 = vsel %vm186, %v251, 0.0
      %253 = vadd.xlane.f32.xlu0 %v252
      %v254 = vpop.xlane.xlu0 %253
      %v255 = vrcp.pop %v254
      %v256 = vmul.f32 %v251, %v255
      %v257 = vpack.c.bf16 %v256, %v256
      %258 = vrot.lane.b32.xlu0 %v158, 48
      %v259 = vpop.permute.xlu0 %258
      %v261 = vsel %vm186, %v257, 0
      %v264 = vsel %vm204, %v259, 0
      %266 = vmatpush.bf16.msra.mxu0 0
      %267 = vmatpush.bf16.msra.mxu0 0
      %268 = vmatpush.bf16.msra.mxu0 0
      %269 = vmatpush.bf16.msra.mxu0 0
      %270 = vmatpush.bf16.msra.mxu0 0
      %271 = vmatpush.bf16.msra.mxu0 0
      %272 = vmatpush.bf16.msra.mxu0 0
      %273 = vmatpush.bf16.msra.mxu0 %v264
      %274 = vmatmul.bf16.gmra.mxu0 %v261
      %v275 = vpop.f32.mrf.mxu0
      %v276 = vadd.f32 0.0, %v275
      %v277 = vpop.f32.mrf.mxu0
      %278 = vdwg.mxu0
      %280 = vrot.lane.b32.xlu0 %v276, 16
      %v281 = vpop.permute.xlu0 %280
      %v283 = vsel %vm161, %v218, %v281
      %v284 = vpack.c.bf16 %v283, %v283
      %vm285 = vcmask 257024
      %286 = vst.msk [vmem:[%s152] sm:$0xf] %vm285, %v284
      %p287 = scmp.lt.s32.totalorder %s13, 1
      %s288 = scalar_select %p287, %s13, 1
      %s289 = smul.addr %s288, 4
      %s290 = scalar_lea.vmem %s2, %s289
      // Predicated region
      $region29: #{bert_encoder_forward.12} parent=27 // pred_check
        %p291 = pneg %p83
      $region30: #{bert_encoder_forward.12} parent=27 // pred_check_branch
        %293 = sbr.rel (%p291) target = $region32
      $region31: #{bert_encoder_forward.12} parent=27 // pred_region
        _
      $region32: #{bert_encoder_forward.12} parent=27 // pred_fallthru
        _
    $region28: #{bert_encoder_forward.12} parent=5 // pred_fallthru
      _
    %p294 = scmp.le.s32.totalorder 2, %s8
    // Predicated region
    $region33: #{bert_encoder_forward.12} parent=5 // pred_check
      %p295 = pneg %p294
    $region34: #{bert_encoder_forward.12} parent=5 // pred_check_branch
      %297 = sbr.rel (%p295) target = $region36
    $region35: #{bert_encoder_forward.12} parent=5 // pred_region
      %s298 = ssub.s32 %s8, 2
      // Predicated region
      $region37: #{bert_encoder_forward.12} parent=35 // pred_check
        %p299 = pneg %p89
      $region38: #{bert_encoder_forward.12} parent=35 // pred_check_branch
        %301 = sbr.rel (%p299) target = $region40
      $region39: #{bert_encoder_forward.12} parent=35 // pred_region
        %p302 = scmp.lt.s32.totalorder %s14, 1
        %s303 = scalar_select %p302, %s14, 1
        %s304 = smul.addr %s303, 4
        %s305 = scalar_lea.vmem %s2, %s304
      $region40: #{bert_encoder_forward.12} parent=35 // pred_fallthru
        _
    $region36: #{bert_encoder_forward.12} parent=5 // pred_fallthru
      _
  $region6: #{bert_encoder_forward.12} parent=0 // loop_footer
    %s12 = sadd.s32 1, %s8
  $region7: #{bert_encoder_forward.12} parent=0 // loop_footer_branch
    %7 = sbr.rel target = $region3
  $region8: #{bert_encoder_forward.12} parent=0 // loop_exit
    _

// kernel: bert_encoder_forward.13
$region0: #{bert_encoder_forward.13}
  #allocation0 [shape = 'u32[]', space=smem, size = 0x4, offset = 0x4, fixed_abs, tag = 'smem constant byte address 0x4 - core index']
  #allocation1 [shape = 'u32[72,128]{1,0:T(1,128)}', space=vmem, size = 0x9000, scoped, tag = 'internal scratch']
  %s0 = inlined_call_operand.vmem [shape: bf16[16,32], index: 0, kind: input, shape index: {}]
  %s1 = inlined_call_operand.vmem [shape: bf16[32,32], index: 1, kind: input, shape index: {}]
  %s2 = inlined_call_operand.vmem [shape: f32[1,32], index: 2, kind: input, shape index: {}]
  %s3 = inlined_call_operand.vmem [shape: f32[16,32], index: 3, kind: input, shape index: {}]
  %s4 = inlined_call_operand.vmem [shape: f32[1,32], index: 4, kind: input, shape index: {}]
  %s5 = inlined_call_operand.vmem [shape: f32[1,32], index: 5, kind: input, shape index: {}]
  %s6 = inlined_call_operand.vmem [shape: f32[16,32], index: 6, kind: output, shape index: {}]
  %s7 = sld [smem:[#allocation0]]
  $region34: #{bert_encoder_forward.13} parent=0
    _
  %s9 = ssub.s32 1, %s7
  %s10 = scalar_select 0, %s9, %s7
  // Predicated region
  $region2: #{bert_encoder_forward.13} parent=0 // pred_check
    _
  $region3: #{bert_encoder_forward.13} parent=0 // pred_check_branch
    %12 = sbr.rel (0) target = $region5
  $region4: #{bert_encoder_forward.13} parent=0 // pred_region
    _
  $region5: #{bert_encoder_forward.13} parent=0 // pred_fallthru
    _
  // Predicated region
  $region6: #{bert_encoder_forward.13} parent=0 // pred_check
    _
  $region7: #{bert_encoder_forward.13} parent=0 // pred_check_branch
    %14 = sbr.rel (0) target = $region9
  $region8: #{bert_encoder_forward.13} parent=0 // pred_region
    _
  $region9: #{bert_encoder_forward.13} parent=0 // pred_fallthru
    _
  // Predicated region
  $region10: #{bert_encoder_forward.13} parent=0 // pred_check
    _
  $region11: #{bert_encoder_forward.13} parent=0 // pred_check_branch
    %16 = sbr.rel (0) target = $region13
  $region12: #{bert_encoder_forward.13} parent=0 // pred_region
    _
  $region13: #{bert_encoder_forward.13} parent=0 // pred_fallthru
    _
  // Predicated region
  $region14: #{bert_encoder_forward.13} parent=0 // pred_check
    _
  $region15: #{bert_encoder_forward.13} parent=0 // pred_check_branch
    %18 = sbr.rel (0) target = $region17
  $region16: #{bert_encoder_forward.13} parent=0 // pred_region
    _
  $region17: #{bert_encoder_forward.13} parent=0 // pred_fallthru
    _
  // Predicated region
  $region18: #{bert_encoder_forward.13} parent=0 // pred_check
    _
  $region19: #{bert_encoder_forward.13} parent=0 // pred_check_branch
    %20 = sbr.rel (0) target = $region21
  $region20: #{bert_encoder_forward.13} parent=0 // pred_region
    _
  $region21: #{bert_encoder_forward.13} parent=0 // pred_fallthru
    _
  // Predicated region
  $region22: #{bert_encoder_forward.13} parent=0 // pred_check
    _
  $region23: #{bert_encoder_forward.13} parent=0 // pred_check_branch
    %22 = sbr.rel (0) target = $region25
  $region24: #{bert_encoder_forward.13} parent=0 // pred_region
    _
  $region25: #{bert_encoder_forward.13} parent=0 // pred_fallthru
    _
  %v24 = vld [vmem:[%s0] sm:$0xf]
  %v25 = vld [vmem:[%s0 + $0x4] sm:$0xf]
  %v26 = vld [vmem:[%s1] sm:$0xf]
  %v27 = vld [vmem:[%s1 + $0x4] sm:$0xf]
  %v28 = vld [vmem:[%s1 + $0x8] sm:$0xf]
  %v29 = vld [vmem:[%s1 + $0xc] sm:$0xf]
  %v30 = vld [vmem:[%s2] sm:$0x1]
  %v32 = vperm.slane %v30, 0
  %v36 = vunpack.c.l.b16 %v24
  %v37 = vunpack.c.l.b16 %v25
  %v38 = vpack.c.b16 %v37, %v36
  %v43 = vunpack.c.l.b16 %v26
  %v44 = vunpack.c.l.b16 %v27
  %v45 = vunpack.c.l.b16 %v28
  %v46 = vunpack.c.l.b16 %v29
  %v47 = vpack.c.b16 %v44, %v43
  %v48 = vpack.c.b16 %v46, %v45
  %vm51 = vcmask 261120
  %v53 = vsel %vm51, %v38, 0
  %55 = vmatpush.bf16.msra.mxu0 0
  %56 = vmatpush.bf16.msra.mxu0 0
  %57 = vmatpush.bf16.msra.mxu0 0
  %58 = vmatpush.bf16.msra.mxu0 0
  %59 = vmatpush.bf16.msra.mxu0 0
  %60 = vmatpush.bf16.msra.mxu0 0
  %61 = vmatpush.bf16.msra.mxu0 %v48
  %62 = vmatpush.bf16.msra.mxu0 %v47
  %63 = vmatmul.bf16.gmra.mxu0 %v53
  %v64 = vpop.f32.mrf.mxu0
  %v65 = vadd.f32 %v32, %v64
  %v66 = vpop.f32.mrf.mxu0
  %v67 = vadd.f32 %v32, %v66
  %68 = vdwg.mxu0
  %v69 = vld [vmem:[%s3] sm:$0xff]
  %v70 = vld [vmem:[%s3 + $0x8] sm:$0xff]
  %v71 = vadd.f32 %v65, %v69
  %v72 = vadd.f32 %v67, %v70
  %v73 = vld [vmem:[%s4] sm:$0x1]
  %v74 = vld [vmem:[%s5] sm:$0x1]
  %v75 = vsel %vm51, %v71, 0.0
  %76 = vadd.xlane.f32.xlu0 %v75
  %v77 = vpop.xlane.xlu0 %76
  %v78 = vsel %vm51, %v72, 0.0
  %79 = vadd.xlane.f32.xlu0 %v78
  %v80 = vpop.xlane.xlu0 %79
  %v81 = vrcp.pop 32.0
  %v82 = vmul.f32 32.0, %v81
  %v83 = vsub.f32 1.0, %v82
  %v84 = vmul.f32 %v81, %v83
  %v85 = vadd.f32 %v81, %v84
  %vm86 = vweird.f32 %v81
  %v87 = vsel %vm86, %v81, %v85
  %v88 = vmul.f32 %v77, %v87
  %v89 = vmul.f32 %v80, %v87
  %v90 = vsub.f32 %v71, %v88
  %v91 = vsub.f32 %v72, %v89
  %v92 = vmul.f32 %v90, %v90
  %v93 = vmul.f32 %v91, %v91
  %v94 = vsel %vm51, %v92, 0.0
  %95 = vadd.xlane.f32.xlu0 %v94
  %v96 = vpop.xlane.xlu0 %95
  %v97 = vsel %vm51, %v93, 0.0
  %98 = vadd.xlane.f32.xlu0 %v97
  %v99 = vpop.xlane.xlu0 %98
  %v100 = vmul.f32 %v96, %v87
  %v101 = vmul.f32 %v99, %v87
  %v102 = vadd.f32 %v100, 1e-12
  %v103 = vadd.f32 %v101, 1e-12
  %v104 = vrsqrt.pop %v102
  %v105 = vmul.f32 %v104, %v102
  %v106 = vmul.f32 %v105, %v104
  %v107 = vmul.f32 0.5, %v106
  %v108 = vsub.f32 1.5, %v107
  %v109 = vmul.f32 %v104, %v108
  %vm110 = vweird.f32 %v102
  %vm111 = vweird.f32 %v104
  %vm112 = vmor %vm110, %vm111
  %v113 = vsel %vm112, %v104, %v109
  %v114 = vrsqrt.pop %v103
  %v115 = vmul.f32 %v114, %v103
  %v116 = vmul.f32 %v115, %v114
  %v117 = vmul.f32 0.5, %v116
  %v118 = vsub.f32 1.5, %v117
  %v119 = vmul.f32 %v114, %v118
  %vm120 = vweird.f32 %v103
  %vm121 = vweird.f32 %v114
  %vm122 = vmor %vm120, %vm121
  %v123 = vsel %vm122, %v114, %v119
  %v124 = vmul.f32 %v90, %v113
  %v125 = vmul.f32 %v91, %v123
  %v127 = vperm.slane %v73, 0
  %v129 = vmul.f32 %v124, %v127
  %v130 = vmul.f32 %v125, %v127
  %v132 = vperm.slane %v74, 0
  %v134 = vadd.f32 %v129, %v132
  %v135 = vadd.f32 %v130, %v132
  %136 = vst.msk [vmem:[%s6] sm:$0xff] %vm51, %v134
  %137 = vst.msk [vmem:[%s6 + $0x8] sm:$0xff] %vm51, %v135
  // Predicated region
  $region26: #{bert_encoder_forward.13} parent=0 // pred_check
    _
  $region27: #{bert_encoder_forward.13} parent=0 // pred_check_branch
    %139 = sbr.rel (0) target = $region29
  $region28: #{bert_encoder_forward.13} parent=0 // pred_region
    _
  $region29: #{bert_encoder_forward.13} parent=0 // pred_fallthru
    _
  // Predicated region
  $region30: #{bert_encoder_forward.13} parent=0 // pred_check
    _
  $region31: #{bert_encoder_forward.13} parent=0 // pred_check_branch
    %141 = sbr.rel (0) target = $region33
  $region32: #{bert_encoder_forward.13} parent=0 // pred_region
    _
  $region33: #{bert_encoder_forward.13} parent=0 // pred_fallthru
    _

// kernel: bert_encoder_forward.19
$region0: #{bert_encoder_forward.19}
  #allocation0 [shape = 'u32[]', space=smem, size = 0x4, offset = 0x4, fixed_abs, tag = 'smem constant byte address 0x4 - core index']
  #allocation1 [shape = 'u32[72,128]{1,0:T(1,128)}', space=vmem, size = 0x9000, scoped, tag = 'internal scratch']
  %s0 = inlined_call_operand.vmem [shape: f32[2,32], index: 0, kind: input, shape index: {}]
  %s1 = inlined_call_operand.vmem [shape: bf16[32,32], index: 1, kind: input, shape index: {}]
  %s2 = inlined_call_operand.vmem [shape: f32[1,32], index: 2, kind: input, shape index: {}]
  %s3 = inlined_call_operand.hbm [shape: f32[2,32], index: 3, kind: output, shape index: {}]
  %s4 = sld [smem:[#allocation0]]
  $region22: #{bert_encoder_forward.19} parent=0
    _
  %s6 = ssub.s32 1, %s4
  %s7 = scalar_select 0, %s6, %s4
  $region1: #{bert_encoder_forward.19} parent=0
    #allocation2 [shape = 'u8[1024]{0}', space=vmem, size = 0x400, scoped, tag = 'output window, operand 0, single buffered']
    #allocation3 [shape = 's32[1]{0}', space=sflag, size = 0x4, scoped, tag = 'scoped memory for bert_encoder_forward.19']
    %8 = vsyncpa [#allocation3], 0
    // Predicated region
    $region2: #{bert_encoder_forward.19} parent=1 // pred_check
      _
    $region3: #{bert_encoder_forward.19} parent=1 // pred_check_branch
      %10 = sbr.rel (0) target = $region5
    $region4: #{bert_encoder_forward.19} parent=1 // pred_region
      _
    $region5: #{bert_encoder_forward.19} parent=1 // pred_fallthru
      _
    // Predicated region
    $region6: #{bert_encoder_forward.19} parent=1 // pred_check
      _
    $region7: #{bert_encoder_forward.19} parent=1 // pred_check_branch
      %12 = sbr.rel (0) target = $region9
    $region8: #{bert_encoder_forward.19} parent=1 // pred_region
      _
    $region9: #{bert_encoder_forward.19} parent=1 // pred_fallthru
      _
    // Predicated region
    $region10: #{bert_encoder_forward.19} parent=1 // pred_check
      _
    $region11: #{bert_encoder_forward.19} parent=1 // pred_check_branch
      %14 = sbr.rel (0) target = $region13
    $region12: #{bert_encoder_forward.19} parent=1 // pred_region
      _
    $region13: #{bert_encoder_forward.19} parent=1 // pred_fallthru
      _
    %v16 = vld [vmem:[%s0] sm:$0x3]
    %v17 = vpack.c.bf16 %v16, %v16
    %v18 = vld [vmem:[%s1] sm:$0xf]
    %v19 = vld [vmem:[%s1 + $0x4] sm:$0xf]
    %v20 = vld [vmem:[%s1 + $0x8] sm:$0xf]
    %v21 = vld [vmem:[%s1 + $0xc] sm:$0xf]
    %v22 = vld [vmem:[%s2] sm:$0x1]
    %v24 = vperm.slane %v22, 0
    %v30 = vunpack.c.l.b16 %v18
    %v31 = vunpack.c.l.b16 %v19
    %v32 = vunpack.c.l.b16 %v20
    %v33 = vunpack.c.l.b16 %v21
    %v34 = vpack.c.b16 %v31, %v30
    %v35 = vpack.c.b16 %v33, %v32
    %vm38 = vcmask 261120
    %v40 = vsel %vm38, %v17, 0
    %42 = vmatpush.bf16.msra.mxu0 0
    %43 = vmatpush.bf16.msra.mxu0 0
    %44 = vmatpush.bf16.msra.mxu0 0
    %45 = vmatpush.bf16.msra.mxu0 0
    %46 = vmatpush.bf16.msra.mxu0 0
    %47 = vmatpush.bf16.msra.mxu0 0
    %48 = vmatpush.bf16.msra.mxu0 %v35
    %49 = vmatpush.bf16.msra.mxu0 %v34
    %50 = vmatmul.bf16.gmra.mxu0 %v40
    %v51 = vpop.f32.mrf.mxu0
    %v52 = vadd.f32 %v24, %v51
    %v53 = vpop.f32.mrf.mxu0
    %54 = vdwg.mxu0
    %v55 = vtanh.pop %v52
    %vm56 = vcmask 254976
    %57 = vst.msk [vmem:[#allocation2] sm:$0x3] %vm56, %v55
    // Predicated region
    $region14: #{bert_encoder_forward.19} parent=1 // pred_check
      _
    $region15: #{bert_encoder_forward.19} parent=1 // pred_check_branch
      %59 = sbr.rel (0) target = $region17
    $region16: #{bert_encoder_forward.19} parent=1 // pred_region
      %61 = vsyncadd [#allocation3], 0
      %s63 = sshll.u32 [#allocation2], 4
      %s64 = int_to_ptr.vmem [resolvable:$true] %s63
      %s65 = sshll.u32 %s3, 4
      %s66 = int_to_ptr.hbm [resolvable:$true] %s65
      %68 = dma.vmem_to_hbm [thread:$0]  %s64, 32, %s66, [#allocation3]
    $region17: #{bert_encoder_forward.19} parent=1 // pred_fallthru
      _
    // Predicated region
    $region18: #{bert_encoder_forward.19} parent=1 // pred_check
      _
    $region19: #{bert_encoder_forward.19} parent=1 // pred_check_branch
      %70 = sbr.rel (0) target = $region21
    $region20: #{bert_encoder_forward.19} parent=1 // pred_region
      %72 = dma.done [#allocation3], 32
    $region21: #{bert_encoder_forward.19} parent=1 // pred_fallthru
      _
    %73 = vsyncpa [#allocation3], 1

// kernel: bert_encoder_forward.14
$region0: #{bert_encoder_forward.14}
  #allocation0 [shape = 'u32[]', space=smem, size = 0x4, offset = 0x4, fixed_abs, tag = 'smem constant byte address 0x4 - core index']
  #allocation1 [shape = 'u32[72,128]{1,0:T(1,128)}', space=vmem, size = 0x9000, scoped, tag = 'internal scratch']
  %s0 = inlined_call_operand.vmem [shape: f32[16,32], index: 0, kind: input, shape index: {}]
  %s1 = inlined_call_operand.vmem [shape: bf16[32,64], index: 1, kind: input, shape index: {}]
  %s2 = inlined_call_operand.vmem [shape: f32[1,64], index: 2, kind: input, shape index: {}]
  %s3 = inlined_call_operand.vmem [shape: bf16[64,32], index: 3, kind: input, shape index: {}]
  %s4 = inlined_call_operand.vmem [shape: f32[1,32], index: 4, kind: input, shape index: {}]
  %s5 = inlined_call_operand.vmem [shape: f32[1,32], index: 5, kind: input, shape index: {}]
  %s6 = inlined_call_operand.vmem [shape: f32[1,32], index: 6, kind: input, shape index: {}]
  %s7 = inlined_call_operand.vmem [shape: f32[16,32], index: 7, kind: output, shape index: {}]
  %s8 = sld [smem:[#allocation0]]
  $region38: #{bert_encoder_forward.14} parent=0
    _
  %s10 = ssub.s32 1, %s8
  %s11 = scalar_select 0, %s10, %s8
  // Predicated region
  $region2: #{bert_encoder_forward.14} parent=0 // pred_check
    _
  $region3: #{bert_encoder_forward.14} parent=0 // pred_check_branch
    %13 = sbr.rel (0) target = $region5
  $region4: #{bert_encoder_forward.14} parent=0 // pred_region
    _
  $region5: #{bert_encoder_forward.14} parent=0 // pred_fallthru
    _
  // Predicated region
  $region6: #{bert_encoder_forward.14} parent=0 // pred_check
    _
  $region7: #{bert_encoder_forward.14} parent=0 // pred_check_branch
    %15 = sbr.rel (0) target = $region9
  $region8: #{bert_encoder_forward.14} parent=0 // pred_region
    _
  $region9: #{bert_encoder_forward.14} parent=0 // pred_fallthru
    _
  // Predicated region
  $region10: #{bert_encoder_forward.14} parent=0 // pred_check
    _
  $region11: #{bert_encoder_forward.14} parent=0 // pred_check_branch
    %17 = sbr.rel (0) target = $region13
  $region12: #{bert_encoder_forward.14} parent=0 // pred_region
    _
  $region13: #{bert_encoder_forward.14} parent=0 // pred_fallthru
    _
  // Predicated region
  $region14: #{bert_encoder_forward.14} parent=0 // pred_check
    _
  $region15: #{bert_encoder_forward.14} parent=0 // pred_check_branch
    %19 = sbr.rel (0) target = $region17
  $region16: #{bert_encoder_forward.14} parent=0 // pred_region
    _
  $region17: #{bert_encoder_forward.14} parent=0 // pred_fallthru
    _
  // Predicated region
  $region18: #{bert_encoder_forward.14} parent=0 // pred_check
    _
  $region19: #{bert_encoder_forward.14} parent=0 // pred_check_branch
    %21 = sbr.rel (0) target = $region21
  $region20: #{bert_encoder_forward.14} parent=0 // pred_region
    _
  $region21: #{bert_encoder_forward.14} parent=0 // pred_fallthru
    _
  // Predicated region
  $region22: #{bert_encoder_forward.14} parent=0 // pred_check
    _
  $region23: #{bert_encoder_forward.14} parent=0 // pred_check_branch
    %23 = sbr.rel (0) target = $region25
  $region24: #{bert_encoder_forward.14} parent=0 // pred_region
    _
  $region25: #{bert_encoder_forward.14} parent=0 // pred_fallthru
    _
  // Predicated region
  $region26: #{bert_encoder_forward.14} parent=0 // pred_check
    _
  $region27: #{bert_encoder_forward.14} parent=0 // pred_check_branch
    %25 = sbr.rel (0) target = $region29
  $region28: #{bert_encoder_forward.14} parent=0 // pred_region
    _
  $region29: #{bert_encoder_forward.14} parent=0 // pred_fallthru
    _
  %v27 = vld [vmem:[%s0] sm:$0xff]
  %v28 = vld [vmem:[%s0 + $0x8] sm:$0xff]
  %v29 = vpack.c.bf16 %v28, %v27
  %v30 = vld [vmem:[%s1] sm:$0xf]
  %v31 = vld [vmem:[%s1 + $0x4] sm:$0xf]
  %v32 = vld [vmem:[%s1 + $0x8] sm:$0xf]
  %v33 = vld [vmem:[%s1 + $0xc] sm:$0xf]
  %v34 = vld [vmem:[%s2] sm:$0x1]
  %v36 = vperm.slane %v34, 0
  %v42 = vunpack.c.l.b16 %v30
  %v43 = vunpack.c.l.b16 %v31
  %v44 = vunpack.c.l.b16 %v32
  %v45 = vunpack.c.l.b16 %v33
  %v46 = vpack.c.b16 %v43, %v42
  %v47 = vpack.c.b16 %v45, %v44
  %vm50 = vcmask 261120
  %v52 = vsel %vm50, %v29, 0
  %54 = vmatpush.bf16.msra.mxu0 0
  %55 = vmatpush.bf16.msra.mxu0 0
  %56 = vmatpush.bf16.msra.mxu0 0
  %57 = vmatpush.bf16.msra.mxu0 0
  %58 = vmatpush.bf16.msra.mxu0 0
  %59 = vmatpush.bf16.msra.mxu0 0
  %60 = vmatpush.bf16.msra.mxu0 %v47
  %61 = vmatpush.bf16.msra.mxu0 %v46
  %62 = vmatmul.bf16.gmra.mxu0 %v52
  %v63 = vpop.f32.mrf.mxu0
  %v64 = vadd.f32 %v36, %v63
  %v65 = vpop.f32.mrf.mxu0
  %v66 = vadd.f32 %v36, %v65
  %67 = vdwg.mxu0
  %v68 = vmul.f32 %v64, 0.5
  %v69 = vmul.f32 %v66, 0.5
  %v70 = vmul.f32 %v64, 0.044715
  %v71 = vmul.f32 %v66, 0.044715
  %v72 = vmul.f32 %v70, %v64
  %v73 = vmul.f32 %v71, %v66
  %v74 = vmul.f32 %v72, %v64
  %v75 = vmul.f32 %v73, %v66
  %v76 = vadd.f32 %v64, %v74
  %v77 = vadd.f32 %v66, %v75
  %v78 = vmul.f32 %v76, 0.7978846
  %v79 = vmul.f32 %v77, 0.7978846
  %v80 = vtanh.pop %v78
  %v81 = vtanh.pop %v79
  %v82 = vadd.f32 %v80, 1.0
  %v83 = vadd.f32 %v81, 1.0
  %v84 = vmul.f32 %v68, %v82
  %v85 = vmul.f32 %v69, %v83
  %v86 = vpack.c.bf16 %v85, %v84
  %v87 = vld [vmem:[%s3] sm:$0xf]
  %v88 = vld [vmem:[%s3 + $0x4] sm:$0xf]
  %v89 = vld [vmem:[%s3 + $0x8] sm:$0xf]
  %v90 = vld [vmem:[%s3 + $0xc] sm:$0xf]
  %v91 = vld [vmem:[%s3 + $0x10] sm:$0xf]
  %v92 = vld [vmem:[%s3 + $0x14] sm:$0xf]
  %v93 = vld [vmem:[%s3 + $0x18] sm:$0xf]
  %v94 = vld [vmem:[%s3 + $0x1c] sm:$0xf]
  %v95 = vld [vmem:[%s4] sm:$0x1]
  %v97 = vperm.slane %v95, 0
  %v107 = vunpack.c.l.b16 %v87
  %v108 = vunpack.c.l.b16 %v88
  %v109 = vunpack.c.l.b16 %v89
  %v110 = vunpack.c.l.b16 %v90
  %v111 = vunpack.c.l.b16 %v91
  %v112 = vunpack.c.l.b16 %v92
  %v113 = vunpack.c.l.b16 %v93
  %v114 = vunpack.c.l.b16 %v94
  %v115 = vpack.c.b16 %v108, %v107
  %v116 = vpack.c.b16 %v110, %v109
  %v117 = vpack.c.b16 %v112, %v111
  %v118 = vpack.c.b16 %v114, %v113
  %vm123 = vcmask 523264
  %v125 = vsel %vm123, %v86, 0
  %127 = vmatpush.bf16.msra.mxu0 0
  %128 = vmatpush.bf16.msra.mxu0 0
  %129 = vmatpush.bf16.msra.mxu0 0
  %130 = vmatpush.bf16.msra.mxu0 0
  %131 = vmatpush.bf16.msra.mxu0 %v118
  %132 = vmatpush.bf16.msra.mxu0 %v117
  %133 = vmatpush.bf16.msra.mxu0 %v116
  %134 = vmatpush.bf16.msra.mxu0 %v115
  %135 = vmatmul.bf16.gmra.mxu0 %v125
  %v136 = vpop.f32.mrf.mxu0
  %v137 = vadd.f32 %v97, %v136
  %v138 = vpop.f32.mrf.mxu0
  %v139 = vadd.f32 %v97, %v138
  %140 = vdwg.mxu0
  %v141 = vadd.f32 %v137, %v27
  %v142 = vadd.f32 %v139, %v28
  %v143 = vld [vmem:[%s5] sm:$0x1]
  %v144 = vld [vmem:[%s6] sm:$0x1]
  %v145 = vsel %vm50, %v141, 0.0
  %146 = vadd.xlane.f32.xlu0 %v145
  %v147 = vpop.xlane.xlu0 %146
  %v148 = vsel %vm50, %v142, 0.0
  %149 = vadd.xlane.f32.xlu0 %v148
  %v150 = vpop.xlane.xlu0 %149
  %v151 = vrcp.pop 32.0
  %v152 = vmul.f32 32.0, %v151
  %v153 = vsub.f32 1.0, %v152
  %v154 = vmul.f32 %v151, %v153
  %v155 = vadd.f32 %v151, %v154
  %vm156 = vweird.f32 %v151
  %v157 = vsel %vm156, %v151, %v155
  %v158 = vmul.f32 %v147, %v157
  %v159 = vmul.f32 %v150, %v157
  %v160 = vsub.f32 %v141, %v158
  %v161 = vsub.f32 %v142, %v159
  %v162 = vmul.f32 %v160, %v160
  %v163 = vmul.f32 %v161, %v161
  %v164 = vsel %vm50, %v162, 0.0
  %165 = vadd.xlane.f32.xlu0 %v164
  %v166 = vpop.xlane.xlu0 %165
  %v167 = vsel %vm50, %v163, 0.0
  %168 = vadd.xlane.f32.xlu0 %v167
  %v169 = vpop.xlane.xlu0 %168
  %v170 = vmul.f32 %v166, %v157
  %v171 = vmul.f32 %v169, %v157
  %v172 = vadd.f32 %v170, 1e-12
  %v173 = vadd.f32 %v171, 1e-12
  %v174 = vrsqrt.pop %v172
  %v175 = vmul.f32 %v174, %v172
  %v176 = vmul.f32 %v175, %v174
  %v177 = vmul.f32 0.5, %v176
  %v178 = vsub.f32 1.5, %v177
  %v179 = vmul.f32 %v174, %v178
  %vm180 = vweird.f32 %v172
  %vm181 = vweird.f32 %v174
  %vm182 = vmor %vm180, %vm181
  %v183 = vsel %vm182, %v174, %v179
  %v184 = vrsqrt.pop %v173
  %v185 = vmul.f32 %v184, %v173
  %v186 = vmul.f32 %v185, %v184
  %v187 = vmul.f32 0.5, %v186
  %v188 = vsub.f32 1.5, %v187
  %v189 = vmul.f32 %v184, %v188
  %vm190 = vweird.f32 %v173
  %vm191 = vweird.f32 %v184
  %vm192 = vmor %vm190, %vm191
  %v193 = vsel %vm192, %v184, %v189
  %v194 = vmul.f32 %v160, %v183
  %v195 = vmul.f32 %v161, %v193
  %v197 = vperm.slane %v143, 0
  %v199 = vmul.f32 %v194, %v197
  %v200 = vmul.f32 %v195, %v197
  %v202 = vperm.slane %v144, 0
  %v204 = vadd.f32 %v199, %v202
  %v205 = vadd.f32 %v200, %v202
  %206 = vst.msk [vmem:[%s7] sm:$0xff] %vm50, %v204
  %207 = vst.msk [vmem:[%s7 + $0x8] sm:$0xff] %vm50, %v205
  // Predicated region
  $region30: #{bert_encoder_forward.14} parent=0 // pred_check
    _
  $region31: #{bert_encoder_forward.14} parent=0 // pred_check_branch
    %209 = sbr.rel (0) target = $region33
  $region32: #{bert_encoder_forward.14} parent=0 // pred_region
    _
  $region33: #{bert_encoder_forward.14} parent=0 // pred_fallthru
    _
  // Predicated region
  $region34: #{bert_encoder_forward.14} parent=0 // pred_check
    _
  $region35: #{bert_encoder_forward.14} parent=0 // pred_check_branch
    %211 = sbr.rel (0) target = $region37
  $region36: #{bert_encoder_forward.14} parent=0 // pred_region
    _
  $region37: #{bert_encoder_forward.14} parent=0 // pred_fallthru
    _

</llo_original>
